<compile_context>
chip_gen: v5e
topology: v5e:2x2
jax: 0.10.0
libtpu: 0.0.40
codegen_flags: <defaults>
</compile_context>

<pallas_src>
import functools

import jax
import jax.numpy as jnp
from jax import lax
from jax.experimental import pallas as pl
from jax.experimental.pallas import tpu as pltpu

EPS = 1e-5


def _round_up(x, m):
    return (x + m - 1) // m * m


# ---------------------------------------------------------------------------
# Pass A: conv-as-matmul + per-tile channel statistics
# ---------------------------------------------------------------------------
def _conv_stats_kernel(p_ref, w_ref, out_ref, stats_ref):
    # (block_m, K) @ (K, Cp) on the MXU, f32 accumulation.
    acc = jnp.dot(p_ref[...], w_ref[...], preferred_element_type=jnp.float32)
    out_ref[...] = acc.astype(out_ref.dtype)
    # Per-tile partial sums for BatchNorm batch statistics.
    sums = jnp.sum(acc, axis=0, keepdims=True)           # (1, Cp)
    sqs = jnp.sum(acc * acc, axis=0, keepdims=True)      # (1, Cp)
    stats_ref[...] = jnp.concatenate([sums, sqs], axis=0)[None]   # (1, 2, Cp)


# ---------------------------------------------------------------------------
# Pass B: BN affine (+ optional residual) (+ optional ReLU), tiled over M
# ---------------------------------------------------------------------------
def _bn_apply_kernel(x_ref, scale_ref, shift_ref, *rest, apply_relu, has_residual):
    if has_residual:
        res_ref, out_ref = rest
    else:
        (out_ref,) = rest
    y = x_ref[...].astype(jnp.float32) * scale_ref[...] + shift_ref[...]
    if has_residual:
        y = y + res_ref[...].astype(jnp.float32)
    if apply_relu:
        y = jnp.maximum(y, 0.0)
    out_ref[...] = y.astype(out_ref.dtype)


# ---------------------------------------------------------------------------
# conv + BatchNorm (batch stats) [+ residual] [+ relu] wrapper
# ---------------------------------------------------------------------------
def conv_bn(patches, w_mat, gamma, beta, residual=None, apply_relu=False,
            out_dtype=jnp.float32, block_m=512):
    """patches: (M, K), w_mat: (K, Cout), gamma/beta: (Cout,) -> (M, Cout)."""
    M, K = patches.shape
    Kw, Cout = w_mat.shape
    assert K == Kw

    # Tile geometry: block_m rows per grid step (multiple of 16 for bf16
    # sublane packing), output channels padded to a lane-dense multiple of 128.
    block_m = int(min(block_m, _round_up(M, 16)))
    block_m = _round_up(block_m, 16)
    n_tiles = (M + block_m - 1) // block_m
    Mp = n_tiles * block_m
    Cp = _round_up(Cout, 128)

    pat = jnp.pad(patches, ((0, Mp - M), (0, 0)))            # zero rows
    w_p = jnp.pad(w_mat, ((0, 0), (0, Cp - Cout)))           # zero channels
    g_p = jnp.pad(gamma.astype(jnp.float32), (0, Cp - Cout))
    b_p = jnp.pad(beta.astype(jnp.float32), (0, Cp - Cout))

    itemsize = pat.dtype.itemsize
    cost_a = pl.CostEstimate(
        flops=2 * Mp * K * Cp,
        transcendentals=0,
        bytes_accessed=(Mp * K + K * Cp) * itemsize
        + (Mp * Cp + n_tiles * 2 * Cp) * 4,
    )

    conv_out, stats = pl.pallas_call(
        _conv_stats_kernel,
        grid=(n_tiles,),
        in_specs=[
            pl.BlockSpec((block_m, K), lambda i: (i, 0)),
            pl.BlockSpec((K, Cp), lambda i: (0, 0)),     # weights stay resident
        ],
        out_specs=(
            pl.BlockSpec((block_m, Cp), lambda i: (i, 0)),
            pl.BlockSpec((1, 2, Cp), lambda i: (i, 0, 0)),
        ),
        out_shape=(
            jax.ShapeDtypeStruct((Mp, Cp), jnp.float32),
            jax.ShapeDtypeStruct((n_tiles, 2, Cp), jnp.float32),
        ),
        compiler_params=pltpu.CompilerParams(dimension_semantics=("parallel",)),
        cost_estimate=cost_a,
    )(pat, w_p)

    # Global BatchNorm batch statistics (PyTorch training mode: biased variance,
    # eps=1e-5).  Padded rows are exactly zero, so they contribute nothing to
    # either sum; divide by the true row count M.
    sums = jnp.sum(stats[:, 0, :], axis=0)
    sqs = jnp.sum(stats[:, 1, :], axis=0)
    mean = sums / M
    var = jnp.maximum(sqs / M - mean * mean, 0.0)
    inv = lax.rsqrt(var + EPS)
    scale = (g_p * inv).reshape(1, Cp)
    shift = (b_p - mean * g_p * inv).reshape(1, Cp)

    inputs = [conv_out, scale, shift]
    in_specs = [
        pl.BlockSpec((block_m, Cp), lambda i: (i, 0)),
        pl.BlockSpec((1, Cp), lambda i: (0, 0)),
        pl.BlockSpec((1, Cp), lambda i: (0, 0)),
    ]
    if residual is not None:
        res_p = jnp.pad(residual.astype(jnp.float32),
                        ((0, Mp - M), (0, Cp - Cout)))
        inputs.append(res_p)
        in_specs.append(pl.BlockSpec((block_m, Cp), lambda i: (i, 0)))

    cost_b = pl.CostEstimate(
        flops=4 * Mp * Cp,
        transcendentals=0,
        bytes_accessed=(2 + int(residual is not None)) * Mp * Cp * 4,
    )

    kernel_b = functools.partial(_bn_apply_kernel,
                                 apply_relu=apply_relu,
                                 has_residual=residual is not None)
    out = pl.pallas_call(
        kernel_b,
        grid=(n_tiles,),
        in_specs=in_specs,
        out_specs=pl.BlockSpec((block_m, Cp), lambda i: (i, 0)),
        out_shape=jax.ShapeDtypeStruct((Mp, Cp), out_dtype),
        compiler_params=pltpu.CompilerParams(dimension_semantics=("parallel",)),
        cost_estimate=cost_b,
    )(*inputs)

    return out[:M, :Cout]


# ---------------------------------------------------------------------------
# Plain-JAX glue: im2col patch extraction / weight layout conversion
# ---------------------------------------------------------------------------
def im2col(x_nhwc, kh, kw, stride, pad):
    N, H, W, C = x_nhwc.shape
    xp = jnp.pad(x_nhwc, ((0, 0), (pad, pad), (pad, pad), (0, 0)))
    Ho = (H + 2 * pad - kh) // stride + 1
    Wo = (W + 2 * pad - kw) // stride + 1
    cols = []
    for i in range(kh):
        for j in range(kw):
            sl = xp[:, i:i + stride * (Ho - 1) + 1:stride,
                       j:j + stride * (Wo - 1) + 1:stride, :]
            cols.append(sl)
    patches = jnp.concatenate(cols, axis=-1)                 # (N,Ho,Wo,kh*kw*C)
    return patches.reshape(N * Ho * Wo, kh * kw * C), (N, Ho, Wo)


def weight_to_mat(w_oihw, dtype):
    # (Cout, Cin, KH, KW) -> (KH*KW*Cin, Cout), matching im2col concat order.
    Cout, Cin, KH, KW = w_oihw.shape
    return jnp.transpose(w_oihw, (2, 3, 1, 0)).reshape(KH * KW * Cin,
                                                       Cout).astype(dtype)


# ---------------------------------------------------------------------------
# BasicBlock forward (NCHW in / NCHW out, like the PyTorch module)
# ---------------------------------------------------------------------------
@functools.partial(jax.jit, static_argnames=("stride", "compute_dtype", "block_m"))
def basic_block_forward(x_nchw, params, stride, compute_dtype=jnp.bfloat16,
                        block_m=512):
    x32 = jnp.transpose(x_nchw, (0, 2, 3, 1)).astype(jnp.float32)   # NHWC, f32
    N, H, W, Cin = x32.shape
    planes = params["w1"].shape[0]
    xc = x32.astype(compute_dtype)           # bf16 activations feeding the MXU

    # conv1 (3x3, stride, pad=1) + bn1 + relu.  Intermediate kept in bf16
    # since conv2's im2col re-reads it from HBM.
    p1, (_, Ho, Wo) = im2col(xc, 3, 3, stride, 1)
    y1 = conv_bn(p1, weight_to_mat(params["w1"], compute_dtype),
                 params["g1"], params["b1"], apply_relu=True,
                 out_dtype=compute_dtype, block_m=block_m)
    y1_nhwc = y1.reshape(N, Ho, Wo, planes)

    # shortcut branch
    if stride != 1 or Cin != planes:
        psc, _ = im2col(xc, 1, 1, stride, 0)
        sc = conv_bn(psc, weight_to_mat(params["wsc"], compute_dtype),
                     params["gsc"], params["bsc"], apply_relu=False,
                     out_dtype=jnp.float32, block_m=block_m)
    else:
        sc = x32.reshape(N * H * W, Cin)       # identity residual stays f32

    # conv2 (3x3, stride=1, pad=1) + bn2 + residual add + relu (fused in pass B)
    p2, _ = im2col(y1_nhwc, 3, 3, 1, 1)
    y2 = conv_bn(p2, weight_to_mat(params["w2"], compute_dtype),
                 params["g2"], params["b2"], residual=sc, apply_relu=True,
                 out_dtype=jnp.float32, block_m=block_m)

    out = y2.reshape(N, Ho, Wo, planes)
    return jnp.transpose(out, (0, 3, 1, 2))                  # back to NCHW


# ---------------------------------------------------------------------------
# Pure-JAX reference (for correctness check only)
# ---------------------------------------------------------------------------
def _ref_conv(x_nchw, w, stride, pad):
    return lax.conv_general_dilated(
        x_nchw, w, window_strides=(stride, stride),
        padding=((pad, pad), (pad, pad)),
        dimension_numbers=("NCHW", "OIHW", "NCHW"))


def _ref_bn(x_nchw, gamma, beta):
    mean = jnp.mean(x_nchw, axis=(0, 2, 3), keepdims=True)
    var = jnp.mean(x_nchw * x_nchw, axis=(0, 2, 3), keepdims=True) - mean * mean
    g = gamma.reshape(1, -1, 1, 1)
    b = beta.reshape(1, -1, 1, 1)
    return (x_nchw - mean) * lax.rsqrt(var + EPS) * g + b


def basic_block_reference(x_nchw, params, stride):
    Cin = x_nchw.shape[1]
    planes = params["w1"].shape[0]
    out = jax.nn.relu(_ref_bn(_ref_conv(x_nchw, params["w1"], stride, 1),
                              params["g1"], params["b1"]))
    out = _ref_bn(_ref_conv(out, params["w2"], 1, 1), params["g2"], params["b2"])
    if stride != 1 or Cin != planes:
        sc = _ref_bn(_ref_conv(x_nchw, params["wsc"], stride, 0),
                     params["gsc"], params["bsc"])
    else:
        sc = x_nchw
    return jax.nn.relu(out + sc)


# ---------------------------------------------------------------------------
if __name__ == "__main__":
    # NCHW input, in_planes=4, planes=8, stride=1 -> 1x1-conv shortcut path.
    N, in_planes, H, W = 2, 4, 16, 16
    planes, stride = 8, 1

    key = jax.random.PRNGKey(0)
    kx, k1, k2, k3 = jax.random.split(key, 4)
    x = jax.random.normal(kx, (N, in_planes, H, W), dtype=jnp.float32)

    params = {
        "w1": 0.1 * jax.random.normal(k1, (planes, in_planes, 3, 3), jnp.float32),
        "g1": jnp.ones((planes,), jnp.float32),
        "b1": jnp.zeros((planes,), jnp.float32),
        "w2": 0.1 * jax.random.normal(k2, (planes, planes, 3, 3), jnp.float32),
        "g2": jnp.ones((planes,), jnp.float32),
        "b2": jnp.zeros((planes,), jnp.float32),
        "wsc": 0.1 * jax.random.normal(k3, (planes, in_planes, 1, 1), jnp.float32),
        "gsc": jnp.ones((planes,), jnp.float32),
        "bsc": jnp.zeros((planes,), jnp.float32),
    }

    ref = jax.block_until_ready(basic_block_reference(x, params, stride))

    # f32 compute path: tight check of the tiled two-pass kernel math.
    # block_m=128 over M=512 exercises a 4-tile grid + cross-tile stats merge.
    out32 = jax.block_until_ready(
        basic_block_forward(x, params, stride=stride,
                            compute_dtype=jnp.float32, block_m=128))
    assert out32.shape == (N, planes, H // stride, W // stride)
    err32 = float(jnp.max(jnp.abs(out32 - ref)))
    assert jnp.allclose(out32, ref, atol=1e-4, rtol=1e-4), err32

    # bf16 matmul-operand path (perf config): loose check vs f32 reference.
    outbf = jax.block_until_ready(
        basic_block_forward(x, params, stride=stride,
                            compute_dtype=jnp.bfloat16, block_m=128))
    errbf = float(jnp.max(jnp.abs(outbf - ref)))
    assert jnp.allclose(outbf, ref, atol=1e-1, rtol=1e-1), errbf

    # Identity-shortcut path (in_planes == planes, stride == 1).
    k4, k5, k6 = jax.random.split(jax.random.PRNGKey(1), 3)
    x2 = jax.random.normal(k4, (2, planes, 16, 16), jnp.float32)
    params2 = {
        "w1": 0.1 * jax.random.normal(k5, (planes, planes, 3, 3), jnp.float32),
        "g1": jnp.ones((planes,), jnp.float32),
        "b1": jnp.zeros((planes,), jnp.float32),
        "w2": 0.1 * jax.random.normal(k6, (planes, planes, 3, 3), jnp.float32),
        "g2": jnp.ones((planes,), jnp.float32),
        "b2": jnp.zeros((planes,), jnp.float32),
    }
    ref2 = jax.block_until_ready(basic_block_reference(x2, params2, 1))
    out2 = jax.block_until_ready(
        basic_block_forward(x2, params2, stride=1,
                            compute_dtype=jnp.float32, block_m=128))
    err2 = float(jnp.max(jnp.abs(out2 - ref2)))
    assert jnp.allclose(out2, ref2, atol=1e-4, rtol=1e-4), err2

    print("KERNEL_OK")
</pallas_src>

<mosaic_0001>
module attributes {stable_mosaic.version = 11 : i64} {
  func.func @_conv_stats_kernel(%arg0: i32, %arg1: memref<128x36xf32, #tpu.memory_space<vmem>>, %arg2: memref<36x128xf32, #tpu.memory_space<vmem>>, %arg3: memref<128x128xf32, #tpu.memory_space<vmem>>, %arg4: memref<1x2x128xf32, #tpu.memory_space<vmem>>) attributes {dimension_semantics = [#tpu.dimension_semantics<parallel>], iteration_bounds = array<i64: 4>, scalar_prefetch = 0 : i64, scratch_operands = 0 : i64, tpu.core_type = #tpu.core_type<tc>, window_params = [{transform_indices = @transform_0, window_bounds = array<i64: 128, 36>}, {pipeline_mode = #tpu.pipeline_mode<synchronous>, transform_indices = @transform_1, window_bounds = array<i64: 36, 128>}, {transform_indices = @transform_2, window_bounds = array<i64: 128, 128>}, {transform_indices = @transform_3, window_bounds = array<i64: 1, 2, 128>}]} {
    %c0 = arith.constant 0 : index
    %c0_0 = arith.constant 0 : index
    %0 = vector.load %arg1[%c0, %c0_0] : memref<128x36xf32, #tpu.memory_space<vmem>>, vector<128x36xf32>
    %c0_1 = arith.constant 0 : index
    %c0_2 = arith.constant 0 : index
    %1 = vector.load %arg2[%c0_1, %c0_2] : memref<36x128xf32, #tpu.memory_space<vmem>>, vector<36x128xf32>
    %cst = arith.constant dense<0.000000e+00> : vector<128x128xf32>
    %2 = tpu.matmul %0, %1, %cst {dimension_numbers = #tpu.dot_dimension_numbers<[1], [0], [0], [1], [0, 0, 1, 1], [], []>} : vector<128x36xf32>, vector<36x128xf32>, vector<128x128xf32> -> vector<128x128xf32>
    %c0_3 = arith.constant 0 : index
    %c0_4 = arith.constant 0 : index
    %3 = vector.load %arg3[%c0_3, %c0_4] : memref<128x128xf32, #tpu.memory_space<vmem>>, vector<128x128xf32>
    tpu.vector_store %arg3[%c0_3, %c0_4], %2 {strides = array<i32>} : memref<128x128xf32, #tpu.memory_space<vmem>>, vector<128x128xf32>,
    %cst_5 = arith.constant dense<0.000000e+00> : vector<128xf32>
    %4 = vector.multi_reduction <add>, %2, %cst_5 [0] : vector<128x128xf32> to vector<128xf32>
    %5 = vector.shape_cast %4 : vector<128xf32> to vector<1x128xf32>
    %6 = arith.mulf %2, %2 : vector<128x128xf32>
    %cst_6 = arith.constant dense<0.000000e+00> : vector<128xf32>
    %7 = vector.multi_reduction <add>, %6, %cst_6 [0] : vector<128x128xf32> to vector<128xf32>
    %8 = vector.shape_cast %7 : vector<128xf32> to vector<1x128xf32>
    %9 = tpu.concatenate %5, %8 in 0 : vector<1x128xf32>, vector<1x128xf32> -> vector<2x128xf32>
    %10 = vector.shape_cast %9 : vector<2x128xf32> to vector<1x2x128xf32>
    %c0_7 = arith.constant 0 : index
    %c0_8 = arith.constant 0 : index
    %c0_9 = arith.constant 0 : index
    %11 = vector.load %arg4[%c0_7, %c0_8, %c0_9] : memref<1x2x128xf32, #tpu.memory_space<vmem>>, vector<1x2x128xf32>
    tpu.vector_store %arg4[%c0_7, %c0_8, %c0_9], %10 {strides = array<i32>} : memref<1x2x128xf32, #tpu.memory_space<vmem>>, vector<1x2x128xf32>,
    return
  }
  func.func @transform_0(%arg0: i32) -> (i32, i32) {
    %c0_i32 = arith.constant 0 : i32
    %c0_i32_0 = arith.constant 0 : i32
    return %arg0, %c0_i32 : i32, i32
  }
  func.func @transform_1(%arg0: i32) -> (i32, i32) {
    %c0_i32 = arith.constant 0 : i32
    %c0_i32_0 = arith.constant 0 : i32
    %c0_i32_1 = arith.constant 0 : i32
    return %c0_i32, %c0_i32_0 : i32, i32
  }
  func.func @transform_2(%arg0: i32) -> (i32, i32) {
    %c0_i32 = arith.constant 0 : i32
    %c0_i32_0 = arith.constant 0 : i32
    return %arg0, %c0_i32 : i32, i32
  }
  func.func @transform_3(%arg0: i32) -> (i32, i32, i32) {
    %c0_i32 = arith.constant 0 : i32
    %c0_i32_0 = arith.constant 0 : i32
    %c0_i32_1 = arith.constant 0 : i32
    return %arg0, %c0_i32, %c0_i32_0 : i32, i32, i32
  }
}

module attributes {stable_mosaic.version = 11 : i64} {
  func.func @_bn_apply_kernel(%arg0: i32, %arg1: memref<128x128xf32, #tpu.memory_space<vmem>>, %arg2: memref<1x128xf32, #tpu.memory_space<vmem>>, %arg3: memref<1x128xf32, #tpu.memory_space<vmem>>, %arg4: memref<128x128xf32, #tpu.memory_space<vmem>>) attributes {dimension_semantics = [#tpu.dimension_semantics<parallel>], iteration_bounds = array<i64: 4>, scalar_prefetch = 0 : i64, scratch_operands = 0 : i64, tpu.core_type = #tpu.core_type<tc>, window_params = [{transform_indices = @transform_0, window_bounds = array<i64: 128, 128>}, {pipeline_mode = #tpu.pipeline_mode<synchronous>, transform_indices = @transform_1, window_bounds = array<i64: 1, 128>}, {pipeline_mode = #tpu.pipeline_mode<synchronous>, transform_indices = @transform_2, window_bounds = array<i64: 1, 128>}, {transform_indices = @transform_3, window_bounds = array<i64: 128, 128>}]} {
    %c0 = arith.constant 0 : index
    %c0_0 = arith.constant 0 : index
    %0 = vector.load %arg1[%c0, %c0_0] : memref<128x128xf32, #tpu.memory_space<vmem>>, vector<128x128xf32>
    %c0_1 = arith.constant 0 : index
    %c0_2 = arith.constant 0 : index
    %1 = vector.load %arg2[%c0_1, %c0_2] : memref<1x128xf32, #tpu.memory_space<vmem>>, vector<1x128xf32>
    %2 = vector.broadcast %1 : vector<1x128xf32> to vector<128x128xf32>
    %3 = arith.mulf %0, %2 : vector<128x128xf32>
    %c0_3 = arith.constant 0 : index
    %c0_4 = arith.constant 0 : index
    %4 = vector.load %arg3[%c0_3, %c0_4] : memref<1x128xf32, #tpu.memory_space<vmem>>, vector<1x128xf32>
    %5 = vector.broadcast %4 : vector<1x128xf32> to vector<128x128xf32>
    %6 = arith.addf %3, %5 : vector<128x128xf32>
    %cst = arith.constant 0.000000e+00 : f32
    %7 = vector.broadcast %cst : f32 to vector<128x128xf32>
    %8 = arith.maximumf %6, %7 : vector<128x128xf32>
    %c0_5 = arith.constant 0 : index
    %c0_6 = arith.constant 0 : index
    %9 = vector.load %arg4[%c0_5, %c0_6] : memref<128x128xf32, #tpu.memory_space<vmem>>, vector<128x128xf32>
    tpu.vector_store %arg4[%c0_5, %c0_6], %8 {strides = array<i32>} : memref<128x128xf32, #tpu.memory_space<vmem>>, vector<128x128xf32>,
    return
  }
  func.func @transform_0(%arg0: i32) -> (i32, i32) {
    %c0_i32 = arith.constant 0 : i32
    %c0_i32_0 = arith.constant 0 : i32
    return %arg0, %c0_i32 : i32, i32
  }
  func.func @transform_1(%arg0: i32) -> (i32, i32) {
    %c0_i32 = arith.constant 0 : i32
    %c0_i32_0 = arith.constant 0 : i32
    %c0_i32_1 = arith.constant 0 : i32
    return %c0_i32, %c0_i32_0 : i32, i32
  }
  func.func @transform_2(%arg0: i32) -> (i32, i32) {
    %c0_i32 = arith.constant 0 : i32
    %c0_i32_0 = arith.constant 0 : i32
    %c0_i32_1 = arith.constant 0 : i32
    return %c0_i32, %c0_i32_0 : i32, i32
  }
  func.func @transform_3(%arg0: i32) -> (i32, i32) {
    %c0_i32 = arith.constant 0 : i32
    %c0_i32_0 = arith.constant 0 : i32
    return %arg0, %c0_i32 : i32, i32
  }
}

module attributes {stable_mosaic.version = 11 : i64} {
  func.func @_conv_stats_kernel(%arg0: i32, %arg1: memref<128x4xf32, #tpu.memory_space<vmem>>, %arg2: memref<4x128xf32, #tpu.memory_space<vmem>>, %arg3: memref<128x128xf32, #tpu.memory_space<vmem>>, %arg4: memref<1x2x128xf32, #tpu.memory_space<vmem>>) attributes {dimension_semantics = [#tpu.dimension_semantics<parallel>], iteration_bounds = array<i64: 4>, scalar_prefetch = 0 : i64, scratch_operands = 0 : i64, tpu.core_type = #tpu.core_type<tc>, window_params = [{transform_indices = @transform_0, window_bounds = array<i64: 128, 4>}, {pipeline_mode = #tpu.pipeline_mode<synchronous>, transform_indices = @transform_1, window_bounds = array<i64: 4, 128>}, {transform_indices = @transform_2, window_bounds = array<i64: 128, 128>}, {transform_indices = @transform_3, window_bounds = array<i64: 1, 2, 128>}]} {
    %c0 = arith.constant 0 : index
    %c0_0 = arith.constant 0 : index
    %0 = vector.load %arg1[%c0, %c0_0] : memref<128x4xf32, #tpu.memory_space<vmem>>, vector<128x4xf32>
    %c0_1 = arith.constant 0 : index
    %c0_2 = arith.constant 0 : index
    %1 = vector.load %arg2[%c0_1, %c0_2] : memref<4x128xf32, #tpu.memory_space<vmem>>, vector<4x128xf32>
    %cst = arith.constant dense<0.000000e+00> : vector<128x128xf32>
    %2 = tpu.matmul %0, %1, %cst {dimension_numbers = #tpu.dot_dimension_numbers<[1], [0], [0], [1], [0, 0, 1, 1], [], []>} : vector<128x4xf32>, vector<4x128xf32>, vector<128x128xf32> -> vector<128x128xf32>
    %c0_3 = arith.constant 0 : index
    %c0_4 = arith.constant 0 : index
    %3 = vector.load %arg3[%c0_3, %c0_4] : memref<128x128xf32, #tpu.memory_space<vmem>>, vector<128x128xf32>
    tpu.vector_store %arg3[%c0_3, %c0_4], %2 {strides = array<i32>} : memref<128x128xf32, #tpu.memory_space<vmem>>, vector<128x128xf32>,
    %cst_5 = arith.constant dense<0.000000e+00> : vector<128xf32>
    %4 = vector.multi_reduction <add>, %2, %cst_5 [0] : vector<128x128xf32> to vector<128xf32>
    %5 = vector.shape_cast %4 : vector<128xf32> to vector<1x128xf32>
    %6 = arith.mulf %2, %2 : vector<128x128xf32>
    %cst_6 = arith.constant dense<0.000000e+00> : vector<128xf32>
    %7 = vector.multi_reduction <add>, %6, %cst_6 [0] : vector<128x128xf32> to vector<128xf32>
    %8 = vector.shape_cast %7 : vector<128xf32> to vector<1x128xf32>
    %9 = tpu.concatenate %5, %8 in 0 : vector<1x128xf32>, vector<1x128xf32> -> vector<2x128xf32>
    %10 = vector.shape_cast %9 : vector<2x128xf32> to vector<1x2x128xf32>
    %c0_7 = arith.constant 0 : index
    %c0_8 = arith.constant 0 : index
    %c0_9 = arith.constant 0 : index
    %11 = vector.load %arg4[%c0_7, %c0_8, %c0_9] : memref<1x2x128xf32, #tpu.memory_space<vmem>>, vector<1x2x128xf32>
    tpu.vector_store %arg4[%c0_7, %c0_8, %c0_9], %10 {strides = array<i32>} : memref<1x2x128xf32, #tpu.memory_space<vmem>>, vector<1x2x128xf32>,
    return
  }
  func.func @transform_0(%arg0: i32) -> (i32, i32) {
    %c0_i32 = arith.constant 0 : i32
    %c0_i32_0 = arith.constant 0 : i32
    return %arg0, %c0_i32 : i32, i32
  }
  func.func @transform_1(%arg0: i32) -> (i32, i32) {
    %c0_i32 = arith.constant 0 : i32
    %c0_i32_0 = arith.constant 0 : i32
    %c0_i32_1 = arith.constant 0 : i32
    return %c0_i32, %c0_i32_0 : i32, i32
  }
  func.func @transform_2(%arg0: i32) -> (i32, i32) {
    %c0_i32 = arith.constant 0 : i32
    %c0_i32_0 = arith.constant 0 : i32
    return %arg0, %c0_i32 : i32, i32
  }
  func.func @transform_3(%arg0: i32) -> (i32, i32, i32) {
    %c0_i32 = arith.constant 0 : i32
    %c0_i32_0 = arith.constant 0 : i32
    %c0_i32_1 = arith.constant 0 : i32
    return %arg0, %c0_i32, %c0_i32_0 : i32, i32, i32
  }
}

module attributes {stable_mosaic.version = 11 : i64} {
  func.func @_conv_stats_kernel(%arg0: i32, %arg1: memref<128x72xf32, #tpu.memory_space<vmem>>, %arg2: memref<72x128xf32, #tpu.memory_space<vmem>>, %arg3: memref<128x128xf32, #tpu.memory_space<vmem>>, %arg4: memref<1x2x128xf32, #tpu.memory_space<vmem>>) attributes {dimension_semantics = [#tpu.dimension_semantics<parallel>], iteration_bounds = array<i64: 4>, scalar_prefetch = 0 : i64, scratch_operands = 0 : i64, tpu.core_type = #tpu.core_type<tc>, window_params = [{transform_indices = @transform_0, window_bounds = array<i64: 128, 72>}, {pipeline_mode = #tpu.pipeline_mode<synchronous>, transform_indices = @transform_1, window_bounds = array<i64: 72, 128>}, {transform_indices = @transform_2, window_bounds = array<i64: 128, 128>}, {transform_indices = @transform_3, window_bounds = array<i64: 1, 2, 128>}]} {
    %c0 = arith.constant 0 : index
    %c0_0 = arith.constant 0 : index
    %0 = vector.load %arg1[%c0, %c0_0] : memref<128x72xf32, #tpu.memory_space<vmem>>, vector<128x72xf32>
    %c0_1 = arith.constant 0 : index
    %c0_2 = arith.constant 0 : index
    %1 = vector.load %arg2[%c0_1, %c0_2] : memref<72x128xf32, #tpu.memory_space<vmem>>, vector<72x128xf32>
    %cst = arith.constant dense<0.000000e+00> : vector<128x128xf32>
    %2 = tpu.matmul %0, %1, %cst {dimension_numbers = #tpu.dot_dimension_numbers<[1], [0], [0], [1], [0, 0, 1, 1], [], []>} : vector<128x72xf32>, vector<72x128xf32>, vector<128x128xf32> -> vector<128x128xf32>
    %c0_3 = arith.constant 0 : index
    %c0_4 = arith.constant 0 : index
    %3 = vector.load %arg3[%c0_3, %c0_4] : memref<128x128xf32, #tpu.memory_space<vmem>>, vector<128x128xf32>
    tpu.vector_store %arg3[%c0_3, %c0_4], %2 {strides = array<i32>} : memref<128x128xf32, #tpu.memory_space<vmem>>, vector<128x128xf32>,
    %cst_5 = arith.constant dense<0.000000e+00> : vector<128xf32>
    %4 = vector.multi_reduction <add>, %2, %cst_5 [0] : vector<128x128xf32> to vector<128xf32>
    %5 = vector.shape_cast %4 : vector<128xf32> to vector<1x128xf32>
    %6 = arith.mulf %2, %2 : vector<128x128xf32>
    %cst_6 = arith.constant dense<0.000000e+00> : vector<128xf32>
    %7 = vector.multi_reduction <add>, %6, %cst_6 [0] : vector<128x128xf32> to vector<128xf32>
    %8 = vector.shape_cast %7 : vector<128xf32> to vector<1x128xf32>
    %9 = tpu.concatenate %5, %8 in 0 : vector<1x128xf32>, vector<1x128xf32> -> vector<2x128xf32>
    %10 = vector.shape_cast %9 : vector<2x128xf32> to vector<1x2x128xf32>
    %c0_7 = arith.constant 0 : index
    %c0_8 = arith.constant 0 : index
    %c0_9 = arith.constant 0 : index
    %11 = vector.load %arg4[%c0_7, %c0_8, %c0_9] : memref<1x2x128xf32, #tpu.memory_space<vmem>>, vector<1x2x128xf32>
    tpu.vector_store %arg4[%c0_7, %c0_8, %c0_9], %10 {strides = array<i32>} : memref<1x2x128xf32, #tpu.memory_space<vmem>>, vector<1x2x128xf32>,
    return
  }
  func.func @transform_0(%arg0: i32) -> (i32, i32) {
    %c0_i32 = arith.constant 0 : i32
    %c0_i32_0 = arith.constant 0 : i32
    return %arg0, %c0_i32 : i32, i32
  }
  func.func @transform_1(%arg0: i32) -> (i32, i32) {
    %c0_i32 = arith.constant 0 : i32
    %c0_i32_0 = arith.constant 0 : i32
    %c0_i32_1 = arith.constant 0 : i32
    return %c0_i32, %c0_i32_0 : i32, i32
  }
  func.func @transform_2(%arg0: i32) -> (i32, i32) {
    %c0_i32 = arith.constant 0 : i32
    %c0_i32_0 = arith.constant 0 : i32
    return %arg0, %c0_i32 : i32, i32
  }
  func.func @transform_3(%arg0: i32) -> (i32, i32, i32) {
    %c0_i32 = arith.constant 0 : i32
    %c0_i32_0 = arith.constant 0 : i32
    %c0_i32_1 = arith.constant 0 : i32
    return %arg0, %c0_i32, %c0_i32_0 : i32, i32, i32
  }
}

module attributes {stable_mosaic.version = 11 : i64} {
  func.func @_bn_apply_kernel(%arg0: i32, %arg1: memref<128x128xf32, #tpu.memory_space<vmem>>, %arg2: memref<1x128xf32, #tpu.memory_space<vmem>>, %arg3: memref<1x128xf32, #tpu.memory_space<vmem>>, %arg4: memref<128x128xf32, #tpu.memory_space<vmem>>) attributes {dimension_semantics = [#tpu.dimension_semantics<parallel>], iteration_bounds = array<i64: 4>, scalar_prefetch = 0 : i64, scratch_operands = 0 : i64, tpu.core_type = #tpu.core_type<tc>, window_params = [{transform_indices = @transform_0, window_bounds = array<i64: 128, 128>}, {pipeline_mode = #tpu.pipeline_mode<synchronous>, transform_indices = @transform_1, window_bounds = array<i64: 1, 128>}, {pipeline_mode = #tpu.pipeline_mode<synchronous>, transform_indices = @transform_2, window_bounds = array<i64: 1, 128>}, {transform_indices = @transform_3, window_bounds = array<i64: 128, 128>}]} {
    %c0 = arith.constant 0 : index
    %c0_0 = arith.constant 0 : index
    %0 = vector.load %arg1[%c0, %c0_0] : memref<128x128xf32, #tpu.memory_space<vmem>>, vector<128x128xf32>
    %c0_1 = arith.constant 0 : index
    %c0_2 = arith.constant 0 : index
    %1 = vector.load %arg2[%c0_1, %c0_2] : memref<1x128xf32, #tpu.memory_space<vmem>>, vector<1x128xf32>
    %2 = vector.broadcast %1 : vector<1x128xf32> to vector<128x128xf32>
    %3 = arith.mulf %0, %2 : vector<128x128xf32>
    %c0_3 = arith.constant 0 : index
    %c0_4 = arith.constant 0 : index
    %4 = vector.load %arg3[%c0_3, %c0_4] : memref<1x128xf32, #tpu.memory_space<vmem>>, vector<1x128xf32>
    %5 = vector.broadcast %4 : vector<1x128xf32> to vector<128x128xf32>
    %6 = arith.addf %3, %5 : vector<128x128xf32>
    %c0_5 = arith.constant 0 : index
    %c0_6 = arith.constant 0 : index
    %7 = vector.load %arg4[%c0_5, %c0_6] : memref<128x128xf32, #tpu.memory_space<vmem>>, vector<128x128xf32>
    tpu.vector_store %arg4[%c0_5, %c0_6], %6 {strides = array<i32>} : memref<128x128xf32, #tpu.memory_space<vmem>>, vector<128x128xf32>,
    return
  }
  func.func @transform_0(%arg0: i32) -> (i32, i32) {
    %c0_i32 = arith.constant 0 : i32
    %c0_i32_0 = arith.constant 0 : i32
    return %arg0, %c0_i32 : i32, i32
  }
  func.func @transform_1(%arg0: i32) -> (i32, i32) {
    %c0_i32 = arith.constant 0 : i32
    %c0_i32_0 = arith.constant 0 : i32
    %c0_i32_1 = arith.constant 0 : i32
    return %c0_i32, %c0_i32_0 : i32, i32
  }
  func.func @transform_2(%arg0: i32) -> (i32, i32) {
    %c0_i32 = arith.constant 0 : i32
    %c0_i32_0 = arith.constant 0 : i32
    %c0_i32_1 = arith.constant 0 : i32
    return %c0_i32, %c0_i32_0 : i32, i32
  }
  func.func @transform_3(%arg0: i32) -> (i32, i32) {
    %c0_i32 = arith.constant 0 : i32
    %c0_i32_0 = arith.constant 0 : i32
    return %arg0, %c0_i32 : i32, i32
  }
}

module attributes {stable_mosaic.version = 11 : i64} {
  func.func @_bn_apply_kernel(%arg0: i32, %arg1: memref<128x128xf32, #tpu.memory_space<vmem>>, %arg2: memref<1x128xf32, #tpu.memory_space<vmem>>, %arg3: memref<1x128xf32, #tpu.memory_space<vmem>>, %arg4: memref<128x128xf32, #tpu.memory_space<vmem>>, %arg5: memref<128x128xf32, #tpu.memory_space<vmem>>) attributes {dimension_semantics = [#tpu.dimension_semantics<parallel>], iteration_bounds = array<i64: 4>, scalar_prefetch = 0 : i64, scratch_operands = 0 : i64, tpu.core_type = #tpu.core_type<tc>, window_params = [{transform_indices = @transform_0, window_bounds = array<i64: 128, 128>}, {pipeline_mode = #tpu.pipeline_mode<synchronous>, transform_indices = @transform_1, window_bounds = array<i64: 1, 128>}, {pipeline_mode = #tpu.pipeline_mode<synchronous>, transform_indices = @transform_2, window_bounds = array<i64: 1, 128>}, {transform_indices = @transform_3, window_bounds = array<i64: 128, 128>}, {transform_indices = @transform_4, window_bounds = array<i64: 128, 128>}]} {
    %c0 = arith.constant 0 : index
    %c0_0 = arith.constant 0 : index
    %0 = vector.load %arg1[%c0, %c0_0] : memref<128x128xf32, #tpu.memory_space<vmem>>, vector<128x128xf32>
    %c0_1 = arith.constant 0 : index
    %c0_2 = arith.constant 0 : index
    %1 = vector.load %arg2[%c0_1, %c0_2] : memref<1x128xf32, #tpu.memory_space<vmem>>, vector<1x128xf32>
    %2 = vector.broadcast %1 : vector<1x128xf32> to vector<128x128xf32>
    %3 = arith.mulf %0, %2 : vector<128x128xf32>
    %c0_3 = arith.constant 0 : index
    %c0_4 = arith.constant 0 : index
    %4 = vector.load %arg3[%c0_3, %c0_4] : memref<1x128xf32, #tpu.memory_space<vmem>>, vector<1x128xf32>
    %5 = vector.broadcast %4 : vector<1x128xf32> to vector<128x128xf32>
    %6 = arith.addf %3, %5 : vector<128x128xf32>
    %c0_5 = arith.constant 0 : index
    %c0_6 = arith.constant 0 : index
    %7 = vector.load %arg4[%c0_5, %c0_6] : memref<128x128xf32, #tpu.memory_space<vmem>>, vector<128x128xf32>
    %8 = arith.addf %6, %7 : vector<128x128xf32>
    %cst = arith.constant 0.000000e+00 : f32
    %9 = vector.broadcast %cst : f32 to vector<128x128xf32>
    %10 = arith.maximumf %8, %9 : vector<128x128xf32>
    %c0_7 = arith.constant 0 : index
    %c0_8 = arith.constant 0 : index
    %11 = vector.load %arg5[%c0_7, %c0_8] : memref<128x128xf32, #tpu.memory_space<vmem>>, vector<128x128xf32>
    tpu.vector_store %arg5[%c0_7, %c0_8], %10 {strides = array<i32>} : memref<128x128xf32, #tpu.memory_space<vmem>>, vector<128x128xf32>,
    return
  }
  func.func @transform_0(%arg0: i32) -> (i32, i32) {
    %c0_i32 = arith.constant 0 : i32
    %c0_i32_0 = arith.constant 0 : i32
    return %arg0, %c0_i32 : i32, i32
  }
  func.func @transform_1(%arg0: i32) -> (i32, i32) {
    %c0_i32 = arith.constant 0 : i32
    %c0_i32_0 = arith.constant 0 : i32
    %c0_i32_1 = arith.constant 0 : i32
    return %c0_i32, %c0_i32_0 : i32, i32
  }
  func.func @transform_2(%arg0: i32) -> (i32, i32) {
    %c0_i32 = arith.constant 0 : i32
    %c0_i32_0 = arith.constant 0 : i32
    %c0_i32_1 = arith.constant 0 : i32
    return %c0_i32, %c0_i32_0 : i32, i32
  }
  func.func @transform_3(%arg0: i32) -> (i32, i32) {
    %c0_i32 = arith.constant 0 : i32
    %c0_i32_0 = arith.constant 0 : i32
    return %arg0, %c0_i32 : i32, i32
  }
  func.func @transform_4(%arg0: i32) -> (i32, i32) {
    %c0_i32 = arith.constant 0 : i32
    %c0_i32_0 = arith.constant 0 : i32
    return %arg0, %c0_i32 : i32, i32
  }
}

</mosaic_0001>

<llo_original>
// kernel: basic_block_forward.7
$region0: #{basic_block_forward.7}
  #allocation0 [shape = 'u32[]', space=smem, size = 0x4, offset = 0x4, fixed_abs, tag = 'smem constant byte address 0x4 - core index']
  #allocation1 [shape = 'u32[72,128]{1,0:T(1,128)}', space=vmem, size = 0x9000, scoped, tag = 'internal scratch']
  %s0 = inlined_call_operand.vmem [shape: f32[512,128], index: 0, kind: input, shape index: {}]
  %s1 = inlined_call_operand.vmem [shape: f32[1,128], index: 1, kind: input, shape index: {}]
  %s2 = inlined_call_operand.vmem [shape: f32[1,128], index: 2, kind: input, shape index: {}]
  %s3 = inlined_call_operand.vmem [shape: f32[512,128], index: 3, kind: output, shape index: {}]
  %s4 = sld [smem:[#allocation0]]
  $region45: #{basic_block_forward.7} parent=0
    _
  %s6 = ssub.s32 1, %s4
  %s7 = scalar_select 0, %s6, %s4
  loop: start=0, step=1, limit=6
  $region2: #{basic_block_forward.7} parent=0 // loop_pre_header
    _
  $region3: #{basic_block_forward.7} parent=0 // loop_header
    %s9 = sphi 0, %s13
    %p10 = scmp.ge.s32.totalorder %s9, 6
    %s19 = sphi 0, %s21
    %s22 = sphi 0, %s19
    %s23 = sphi 0, %s22
    %s39 = sphi 0, %s23
    %s43 = sphi 0, %s43
    %s45 = sphi 0, %s43
    %s46 = sphi 0, %s45
    %s60 = sphi 0, %s46
    %s64 = sphi 0, %s64
    %s66 = sphi 0, %s64
    %s67 = sphi 0, %s66
    %s81 = sphi 0, %s67
    %s87 = sphi 0, %s89
    %s90 = sphi 0, %s87
    %s91 = sphi 0, %s90
    %s107 = sphi 0, %s91
  $region4: #{basic_block_forward.7} parent=0 // loop_header_branch
    %12 = sbr.rel (%p10) target = $region8
  $region5: #{basic_block_forward.7} parent=0 // loop_body
    %s14 = ssub.s32 %s9, 1
    %s15 = ssub.s32 %s9, 2
    %s16 = sadd.s32 %s9, 1
    %s17 = ssub.s32 %s9, %s16
    %p18 = scmp.eq.s32.totalorder %s17, 0
    %s20 = sadd.s32 %s19, 1
    %s21 = scalar_select %p18, %s19, %s20
    %p24 = pneg %p18
    %p25 = scmp.eq.s32.totalorder %s9, 3
    %p26 = por %p24, %p25
    %p27 = scmp.ne.s32.totalorder %s19, %s22
    %p28 = scmp.eq.s32.totalorder %s9, 0
    %p29 = por %p27, %p28
    %p30 = scmp.ne.s32.totalorder %s19, %s22
    %p31 = scmp.eq.s32.totalorder %s14, 3
    %p32 = por %p30, %p31
    %p33 = scmp.ne.s32.totalorder %s22, %s23
    %p34 = scmp.eq.s32.totalorder %s14, 0
    %p35 = por %p33, %p34
    %p36 = scmp.ne.s32.totalorder %s22, %s23
    %p37 = scmp.eq.s32.totalorder %s15, 3
    %p38 = por %p36, %p37
    %p40 = scmp.ne.s32.totalorder %s23, %s39
    %p41 = scmp.eq.s32.totalorder %s15, 0
    %p42 = por %p40, %p41
    %s44 = sadd.s32 %s43, 1
    %p47 = scmp.eq.s32.totalorder %s9, 3
    %p48 = scmp.ne.s32.totalorder %s43, %s45
    %p49 = scmp.eq.s32.totalorder %s9, 0
    %p50 = por %p48, %p49
    %p51 = scmp.ne.s32.totalorder %s43, %s45
    %p52 = scmp.eq.s32.totalorder %s14, 3
    %p53 = por %p51, %p52
    %p54 = scmp.ne.s32.totalorder %s45, %s46
    %p55 = scmp.eq.s32.totalorder %s14, 0
    %p56 = por %p54, %p55
    %p57 = scmp.ne.s32.totalorder %s45, %s46
    %p58 = scmp.eq.s32.totalorder %s15, 3
    %p59 = por %p57, %p58
    %p61 = scmp.ne.s32.totalorder %s46, %s60
    %p62 = scmp.eq.s32.totalorder %s15, 0
    %p63 = por %p61, %p62
    %s65 = sadd.s32 %s64, 1
    %p68 = scmp.eq.s32.totalorder %s9, 3
    %p69 = scmp.ne.s32.totalorder %s64, %s66
    %p70 = scmp.eq.s32.totalorder %s9, 0
    %p71 = por %p69, %p70
    %p72 = scmp.ne.s32.totalorder %s64, %s66
    %p73 = scmp.eq.s32.totalorder %s14, 3
    %p74 = por %p72, %p73
    %p75 = scmp.ne.s32.totalorder %s66, %s67
    %p76 = scmp.eq.s32.totalorder %s14, 0
    %p77 = por %p75, %p76
    %p78 = scmp.ne.s32.totalorder %s66, %s67
    %p79 = scmp.eq.s32.totalorder %s15, 3
    %p80 = por %p78, %p79
    %p82 = scmp.ne.s32.totalorder %s67, %s81
    %p83 = scmp.eq.s32.totalorder %s15, 0
    %p84 = por %p82, %p83
    %s85 = ssub.s32 %s9, %s16
    %p86 = scmp.eq.s32.totalorder %s85, 0
    %s88 = sadd.s32 %s87, 1
    %s89 = scalar_select %p86, %s87, %s88
    %p92 = pneg %p86
    %p93 = scmp.eq.s32.totalorder %s9, 3
    %p94 = por %p92, %p93
    %p95 = scmp.ne.s32.totalorder %s87, %s90
    %p96 = scmp.eq.s32.totalorder %s9, 0
    %p97 = por %p95, %p96
    %p98 = scmp.ne.s32.totalorder %s87, %s90
    %p99 = scmp.eq.s32.totalorder %s14, 3
    %p100 = por %p98, %p99
    %p101 = scmp.ne.s32.totalorder %s90, %s91
    %p102 = scmp.eq.s32.totalorder %s14, 0
    %p103 = por %p101, %p102
    %p104 = scmp.ne.s32.totalorder %s90, %s91
    %p105 = scmp.eq.s32.totalorder %s15, 3
    %p106 = por %p104, %p105
    %p108 = scmp.ne.s32.totalorder %s91, %s107
    %p109 = scmp.eq.s32.totalorder %s15, 0
    %p110 = por %p108, %p109
    %p111 = scmp.le.s32.totalorder 1, %s9
    %p112 = scmp.lt.s32.totalorder %s9, 5
    %p113 = pnand %p111, %p112
    %p114 = pneg %p113
    // Predicated region
    $region9: #{basic_block_forward.7} parent=5 // pred_check
      _
    $region10: #{basic_block_forward.7} parent=5 // pred_check_branch
      %116 = sbr.rel (%p113) target = $region12
    $region11: #{basic_block_forward.7} parent=5 // pred_region
      %s117 = ssub.s32 %s9, 1
      // Predicated region
      $region13: #{basic_block_forward.7} parent=11 // pred_check
        %p118 = pneg %p56
      $region14: #{basic_block_forward.7} parent=11 // pred_check_branch
        %120 = sbr.rel (%p118) target = $region16
      $region15: #{basic_block_forward.7} parent=11 // pred_region
        _
      $region16: #{basic_block_forward.7} parent=11 // pred_fallthru
        _
      // Predicated region
      $region17: #{basic_block_forward.7} parent=11 // pred_check
        %p121 = pneg %p77
      $region18: #{basic_block_forward.7} parent=11 // pred_check_branch
        %123 = sbr.rel (%p121) target = $region20
      $region19: #{basic_block_forward.7} parent=11 // pred_region
        _
      $region20: #{basic_block_forward.7} parent=11 // pred_fallthru
        _
    $region12: #{basic_block_forward.7} parent=5 // pred_fallthru
      _
    %p124 = scmp.lt.s32.totalorder %s9, 4
    // Predicated region
    $region21: #{basic_block_forward.7} parent=5 // pred_check
      %p125 = pneg %p124
    $region22: #{basic_block_forward.7} parent=5 // pred_check_branch
      %127 = sbr.rel (%p125) target = $region24
    $region23: #{basic_block_forward.7} parent=5 // pred_region
      // Predicated region
      $region25: #{basic_block_forward.7} parent=23 // pred_check
        %p128 = pneg %p29
      $region26: #{basic_block_forward.7} parent=23 // pred_check_branch
        %130 = sbr.rel (%p128) target = $region28
      $region27: #{basic_block_forward.7} parent=23 // pred_region
        %s131 = smul.u32 16, %s9
        %p132 = scmp.lt.s32.totalorder %s131, 63
        %s133 = scalar_select %p132, %s131, 63
        %s134 = smul.addr %s133, 8
        %s135 = scalar_lea.vmem %s0, %s134
        %s136 = smul.u32 16, %s9
      $region28: #{basic_block_forward.7} parent=23 // pred_fallthru
        _
    $region24: #{basic_block_forward.7} parent=5 // pred_fallthru
      _
    %p137 = scmp.le.s32.totalorder 1, %s9
    %p138 = scmp.lt.s32.totalorder %s9, 5
    %p139 = pnand %p137, %p138
    %p140 = pneg %p139
    // Predicated region
    $region29: #{basic_block_forward.7} parent=5 // pred_check
      _
    $region30: #{basic_block_forward.7} parent=5 // pred_check_branch
      %142 = sbr.rel (%p139) target = $region32
    $region31: #{basic_block_forward.7} parent=5 // pred_region
      %s143 = ssub.s32 %s9, 1
      %s144 = smul.u32 16, %s14
      %p145 = scmp.lt.s32.totalorder %s144, 63
      %s146 = scalar_select %p145, %s144, 63
      %s147 = smul.addr %s146, 8
      %s148 = scalar_lea.vmem %s0, %s147
      %p149 = pneg %p35
      %p150 = pneg %p32
      %p151 = pneg %p56
      %p152 = pneg %p53
      %p153 = pneg %p77
      %p154 = pneg %p74
      %p155 = pneg %p103
      %p156 = pneg %p100
      %s157 = smul.u32 16, %s14
      %p158 = scmp.lt.s32.totalorder %s157, 63
      %s159 = scalar_select %p158, %s157, 63
      %s160 = smul.addr %s159, 8
      %s161 = scalar_lea.vmem %s3, %s160
      %s162 = smul.u32 16, %s14
      %p163 = scmp.lt.s32.totalorder %s162, 63
      %s164 = scalar_select %p163, %s162, 63
      %s165 = smul.addr %s164, 8
      %s166 = scalar_lea.vmem %s0, %s165
      %s167 = smul.u32 16, %s14
      %s168 = smul.u32 16, %s14
      %p169 = scmp.lt.s32.totalorder %s168, 63
      %s170 = scalar_select %p169, %s168, 63
      %s171 = smul.addr %s170, 8
      %s172 = scalar_lea.vmem %s3, %s171
      %s173 = smul.u32 16, %s14
      %v174 = vld [vmem:[%s166] sm:$0xff]
      %v175 = vld [vmem:[%s166 + $0x8] sm:$0xff]
      %v176 = vld [vmem:[%s166 + $0x10] sm:$0xff]
      %v177 = vld [vmem:[%s166 + $0x18] sm:$0xff]
      %v178 = vld [vmem:[%s166 + $0x20] sm:$0xff]
      %v179 = vld [vmem:[%s166 + $0x28] sm:$0xff]
      %v180 = vld [vmem:[%s166 + $0x30] sm:$0xff]
      %v181 = vld [vmem:[%s166 + $0x38] sm:$0xff]
      %v182 = vld [vmem:[%s166 + $0x40] sm:$0xff]
      %v183 = vld [vmem:[%s166 + $0x48] sm:$0xff]
      %v184 = vld [vmem:[%s166 + $0x50] sm:$0xff]
      %v185 = vld [vmem:[%s166 + $0x58] sm:$0xff]
      %v186 = vld [vmem:[%s166 + $0x60] sm:$0xff]
      %v187 = vld [vmem:[%s166 + $0x68] sm:$0xff]
      %v188 = vld [vmem:[%s166 + $0x70] sm:$0xff]
      %v189 = vld [vmem:[%s166 + $0x78] sm:$0xff]
      %v190 = vld [vmem:[%s1] sm:$0x1]
      %v192 = vperm.slane %v190, 0
      %v194 = vmul.f32 %v174, %v192
      %v195 = vmul.f32 %v175, %v192
      %v196 = vmul.f32 %v176, %v192
      %v197 = vmul.f32 %v177, %v192
      %v198 = vmul.f32 %v178, %v192
      %v199 = vmul.f32 %v179, %v192
      %v200 = vmul.f32 %v180, %v192
      %v201 = vmul.f32 %v181, %v192
      %v202 = vmul.f32 %v182, %v192
      %v203 = vmul.f32 %v183, %v192
      %v204 = vmul.f32 %v184, %v192
      %v205 = vmul.f32 %v185, %v192
      %v206 = vmul.f32 %v186, %v192
      %v207 = vmul.f32 %v187, %v192
      %v208 = vmul.f32 %v188, %v192
      %v209 = vmul.f32 %v189, %v192
      %v210 = vld [vmem:[%s2] sm:$0x1]
      %v212 = vperm.slane %v210, 0
      %v214 = vadd.f32 %v194, %v212
      %v215 = vadd.f32 %v195, %v212
      %v216 = vadd.f32 %v196, %v212
      %v217 = vadd.f32 %v197, %v212
      %v218 = vadd.f32 %v198, %v212
      %v219 = vadd.f32 %v199, %v212
      %v220 = vadd.f32 %v200, %v212
      %v221 = vadd.f32 %v201, %v212
      %v222 = vadd.f32 %v202, %v212
      %v223 = vadd.f32 %v203, %v212
      %v224 = vadd.f32 %v204, %v212
      %v225 = vadd.f32 %v205, %v212
      %v226 = vadd.f32 %v206, %v212
      %v227 = vadd.f32 %v207, %v212
      %v228 = vadd.f32 %v208, %v212
      %v229 = vadd.f32 %v209, %v212
      %v230 = vmax.f32 %v214, 0.0
      %v231 = vmax.f32 %v215, 0.0
      %v232 = vmax.f32 %v216, 0.0
      %v233 = vmax.f32 %v217, 0.0
      %v234 = vmax.f32 %v218, 0.0
      %v235 = vmax.f32 %v219, 0.0
      %v236 = vmax.f32 %v220, 0.0
      %v237 = vmax.f32 %v221, 0.0
      %v238 = vmax.f32 %v222, 0.0
      %v239 = vmax.f32 %v223, 0.0
      %v240 = vmax.f32 %v224, 0.0
      %v241 = vmax.f32 %v225, 0.0
      %v242 = vmax.f32 %v226, 0.0
      %v243 = vmax.f32 %v227, 0.0
      %v244 = vmax.f32 %v228, 0.0
      %v245 = vmax.f32 %v229, 0.0
      %246 = vst [vmem:[%s172] sm:$0xff] %v230
      %247 = vst [vmem:[%s172 + $0x8] sm:$0xff] %v231
      %248 = vst [vmem:[%s172 + $0x10] sm:$0xff] %v232
      %249 = vst [vmem:[%s172 + $0x18] sm:$0xff] %v233
      %250 = vst [vmem:[%s172 + $0x20] sm:$0xff] %v234
      %251 = vst [vmem:[%s172 + $0x28] sm:$0xff] %v235
      %252 = vst [vmem:[%s172 + $0x30] sm:$0xff] %v236
      %253 = vst [vmem:[%s172 + $0x38] sm:$0xff] %v237
      %254 = vst [vmem:[%s172 + $0x40] sm:$0xff] %v238
      %255 = vst [vmem:[%s172 + $0x48] sm:$0xff] %v239
      %256 = vst [vmem:[%s172 + $0x50] sm:$0xff] %v240
      %257 = vst [vmem:[%s172 + $0x58] sm:$0xff] %v241
      %258 = vst [vmem:[%s172 + $0x60] sm:$0xff] %v242
      %259 = vst [vmem:[%s172 + $0x68] sm:$0xff] %v243
      %260 = vst [vmem:[%s172 + $0x70] sm:$0xff] %v244
      %261 = vst [vmem:[%s172 + $0x78] sm:$0xff] %v245
      %s262 = smul.u32 16, %s14
      %p263 = scmp.lt.s32.totalorder %s262, 63
      %s264 = scalar_select %p263, %s262, 63
      %s265 = smul.addr %s264, 8
      %s266 = scalar_lea.vmem %s3, %s265
      // Predicated region
      $region33: #{basic_block_forward.7} parent=31 // pred_check
        %p267 = pneg %p100
      $region34: #{basic_block_forward.7} parent=31 // pred_check_branch
        %269 = sbr.rel (%p267) target = $region36
      $region35: #{basic_block_forward.7} parent=31 // pred_region
        %s270 = smul.u32 16, %s14
      $region36: #{basic_block_forward.7} parent=31 // pred_fallthru
        _
    $region32: #{basic_block_forward.7} parent=5 // pred_fallthru
      _
    %p271 = scmp.le.s32.totalorder 2, %s9
    // Predicated region
    $region37: #{basic_block_forward.7} parent=5 // pred_check
      %p272 = pneg %p271
    $region38: #{basic_block_forward.7} parent=5 // pred_check_branch
      %274 = sbr.rel (%p272) target = $region40
    $region39: #{basic_block_forward.7} parent=5 // pred_region
      %s275 = ssub.s32 %s9, 2
      // Predicated region
      $region41: #{basic_block_forward.7} parent=39 // pred_check
        %p276 = pneg %p106
      $region42: #{basic_block_forward.7} parent=39 // pred_check_branch
        %278 = sbr.rel (%p276) target = $region44
      $region43: #{basic_block_forward.7} parent=39 // pred_region
        %s279 = smul.u32 16, %s15
        %p280 = scmp.lt.s32.totalorder %s279, 63
        %s281 = scalar_select %p280, %s279, 63
        %s282 = smul.addr %s281, 8
        %s283 = scalar_lea.vmem %s3, %s282
      $region44: #{basic_block_forward.7} parent=39 // pred_fallthru
        _
    $region40: #{basic_block_forward.7} parent=5 // pred_fallthru
      _
  $region6: #{basic_block_forward.7} parent=0 // loop_footer
    %s13 = sadd.s32 1, %s9
  $region7: #{basic_block_forward.7} parent=0 // loop_footer_branch
    %8 = sbr.rel target = $region3
  $region8: #{basic_block_forward.7} parent=0 // loop_exit
    _

// kernel: basic_block_forward.6
$region0: #{basic_block_forward.6}
  #allocation0 [shape = 'u32[]', space=smem, size = 0x4, offset = 0x4, fixed_abs, tag = 'smem constant byte address 0x4 - core index']
  #allocation1 [shape = 'u32[72,128]{1,0:T(1,128)}', space=vmem, size = 0x9000, scoped, tag = 'internal scratch']
  %s0 = inlined_call_operand.vmem [shape: f32[512,36], index: 0, kind: input, shape index: {}]
  %s1 = inlined_call_operand.vmem [shape: f32[36,128], index: 1, kind: input, shape index: {}]
  %s2 = inlined_call_operand.vmem [shape: f32[512,128], index: 2, kind: output, shape index: {0}]
  %s3 = inlined_call_operand.vmem [shape: f32[4,2,128], index: 3, kind: output, shape index: {1}]
  %4 = xla_tuple %s2, %s3
  %s5 = sld [smem:[#allocation0]]
  $region49: #{basic_block_forward.6} parent=0
    _
  %s7 = ssub.s32 1, %s5
  %s8 = scalar_select 0, %s7, %s5
  loop: start=0, step=1, limit=6
  $region2: #{basic_block_forward.6} parent=0 // loop_pre_header
    _
  $region3: #{basic_block_forward.6} parent=0 // loop_header
    %s10 = sphi 0, %s14
    %p11 = scmp.ge.s32.totalorder %s10, 6
    %s20 = sphi 0, %s22
    %s23 = sphi 0, %s20
    %s24 = sphi 0, %s23
    %s40 = sphi 0, %s24
    %s44 = sphi 0, %s44
    %s46 = sphi 0, %s44
    %s47 = sphi 0, %s46
    %s61 = sphi 0, %s47
    %s67 = sphi 0, %s69
    %s70 = sphi 0, %s67
    %s71 = sphi 0, %s70
    %s87 = sphi 0, %s71
    %s93 = sphi 0, %s95
    %s96 = sphi 0, %s93
    %s97 = sphi 0, %s96
    %s113 = sphi 0, %s97
  $region4: #{basic_block_forward.6} parent=0 // loop_header_branch
    %13 = sbr.rel (%p11) target = $region8
  $region5: #{basic_block_forward.6} parent=0 // loop_body
    %s15 = ssub.s32 %s10, 1
    %s16 = ssub.s32 %s10, 2
    %s17 = sadd.s32 %s10, 1
    %s18 = ssub.s32 %s10, %s17
    %p19 = scmp.eq.s32.totalorder %s18, 0
    %s21 = sadd.s32 %s20, 1
    %s22 = scalar_select %p19, %s20, %s21
    %p25 = pneg %p19
    %p26 = scmp.eq.s32.totalorder %s10, 3
    %p27 = por %p25, %p26
    %p28 = scmp.ne.s32.totalorder %s20, %s23
    %p29 = scmp.eq.s32.totalorder %s10, 0
    %p30 = por %p28, %p29
    %p31 = scmp.ne.s32.totalorder %s20, %s23
    %p32 = scmp.eq.s32.totalorder %s15, 3
    %p33 = por %p31, %p32
    %p34 = scmp.ne.s32.totalorder %s23, %s24
    %p35 = scmp.eq.s32.totalorder %s15, 0
    %p36 = por %p34, %p35
    %p37 = scmp.ne.s32.totalorder %s23, %s24
    %p38 = scmp.eq.s32.totalorder %s16, 3
    %p39 = por %p37, %p38
    %p41 = scmp.ne.s32.totalorder %s24, %s40
    %p42 = scmp.eq.s32.totalorder %s16, 0
    %p43 = por %p41, %p42
    %s45 = sadd.s32 %s44, 1
    %p48 = scmp.eq.s32.totalorder %s10, 3
    %p49 = scmp.ne.s32.totalorder %s44, %s46
    %p50 = scmp.eq.s32.totalorder %s10, 0
    %p51 = por %p49, %p50
    %p52 = scmp.ne.s32.totalorder %s44, %s46
    %p53 = scmp.eq.s32.totalorder %s15, 3
    %p54 = por %p52, %p53
    %p55 = scmp.ne.s32.totalorder %s46, %s47
    %p56 = scmp.eq.s32.totalorder %s15, 0
    %p57 = por %p55, %p56
    %p58 = scmp.ne.s32.totalorder %s46, %s47
    %p59 = scmp.eq.s32.totalorder %s16, 3
    %p60 = por %p58, %p59
    %p62 = scmp.ne.s32.totalorder %s47, %s61
    %p63 = scmp.eq.s32.totalorder %s16, 0
    %p64 = por %p62, %p63
    %s65 = ssub.s32 %s10, %s17
    %p66 = scmp.eq.s32.totalorder %s65, 0
    %s68 = sadd.s32 %s67, 1
    %s69 = scalar_select %p66, %s67, %s68
    %p72 = pneg %p66
    %p73 = scmp.eq.s32.totalorder %s10, 3
    %p74 = por %p72, %p73
    %p75 = scmp.ne.s32.totalorder %s67, %s70
    %p76 = scmp.eq.s32.totalorder %s10, 0
    %p77 = por %p75, %p76
    %p78 = scmp.ne.s32.totalorder %s67, %s70
    %p79 = scmp.eq.s32.totalorder %s15, 3
    %p80 = por %p78, %p79
    %p81 = scmp.ne.s32.totalorder %s70, %s71
    %p82 = scmp.eq.s32.totalorder %s15, 0
    %p83 = por %p81, %p82
    %p84 = scmp.ne.s32.totalorder %s70, %s71
    %p85 = scmp.eq.s32.totalorder %s16, 3
    %p86 = por %p84, %p85
    %p88 = scmp.ne.s32.totalorder %s71, %s87
    %p89 = scmp.eq.s32.totalorder %s16, 0
    %p90 = por %p88, %p89
    %s91 = ssub.s32 %s10, %s17
    %p92 = scmp.eq.s32.totalorder %s91, 0
    %s94 = sadd.s32 %s93, 1
    %s95 = scalar_select %p92, %s93, %s94
    %p98 = pneg %p92
    %p99 = scmp.eq.s32.totalorder %s10, 3
    %p100 = por %p98, %p99
    %p101 = scmp.ne.s32.totalorder %s93, %s96
    %p102 = scmp.eq.s32.totalorder %s10, 0
    %p103 = por %p101, %p102
    %p104 = scmp.ne.s32.totalorder %s93, %s96
    %p105 = scmp.eq.s32.totalorder %s15, 3
    %p106 = por %p104, %p105
    %p107 = scmp.ne.s32.totalorder %s96, %s97
    %p108 = scmp.eq.s32.totalorder %s15, 0
    %p109 = por %p107, %p108
    %p110 = scmp.ne.s32.totalorder %s96, %s97
    %p111 = scmp.eq.s32.totalorder %s16, 3
    %p112 = por %p110, %p111
    %p114 = scmp.ne.s32.totalorder %s97, %s113
    %p115 = scmp.eq.s32.totalorder %s16, 0
    %p116 = por %p114, %p115
    %p117 = scmp.le.s32.totalorder 1, %s10
    %p118 = scmp.lt.s32.totalorder %s10, 5
    %p119 = pnand %p117, %p118
    %p120 = pneg %p119
    // Predicated region
    $region9: #{basic_block_forward.6} parent=5 // pred_check
      _
    $region10: #{basic_block_forward.6} parent=5 // pred_check_branch
      %122 = sbr.rel (%p119) target = $region12
    $region11: #{basic_block_forward.6} parent=5 // pred_region
      %s123 = ssub.s32 %s10, 1
      // Predicated region
      $region13: #{basic_block_forward.6} parent=11 // pred_check
        %p124 = pneg %p57
      $region14: #{basic_block_forward.6} parent=11 // pred_check_branch
        %126 = sbr.rel (%p124) target = $region16
      $region15: #{basic_block_forward.6} parent=11 // pred_region
        _
      $region16: #{basic_block_forward.6} parent=11 // pred_fallthru
        _
    $region12: #{basic_block_forward.6} parent=5 // pred_fallthru
      _
    %p127 = scmp.lt.s32.totalorder %s10, 4
    // Predicated region
    $region17: #{basic_block_forward.6} parent=5 // pred_check
      %p128 = pneg %p127
    $region18: #{basic_block_forward.6} parent=5 // pred_check_branch
      %130 = sbr.rel (%p128) target = $region20
    $region19: #{basic_block_forward.6} parent=5 // pred_region
      // Predicated region
      $region21: #{basic_block_forward.6} parent=19 // pred_check
        %p131 = pneg %p30
      $region22: #{basic_block_forward.6} parent=19 // pred_check_branch
        %133 = sbr.rel (%p131) target = $region24
      $region23: #{basic_block_forward.6} parent=19 // pred_region
        %s134 = smul.u32 16, %s10
        %p135 = scmp.lt.s32.totalorder %s134, 63
        %s136 = scalar_select %p135, %s134, 63
        %s137 = smul.addr %s136, 8
        %s138 = scalar_lea.vmem %s0, %s137
        %s139 = smul.u32 16, %s10
      $region24: #{basic_block_forward.6} parent=19 // pred_fallthru
        _
    $region20: #{basic_block_forward.6} parent=5 // pred_fallthru
      _
    %p140 = scmp.le.s32.totalorder 1, %s10
    %p141 = scmp.lt.s32.totalorder %s10, 5
    %p142 = pnand %p140, %p141
    %p143 = pneg %p142
    // Predicated region
    $region25: #{basic_block_forward.6} parent=5 // pred_check
      _
    $region26: #{basic_block_forward.6} parent=5 // pred_check_branch
      %145 = sbr.rel (%p142) target = $region28
    $region27: #{basic_block_forward.6} parent=5 // pred_region
      %s146 = ssub.s32 %s10, 1
      %s147 = smul.u32 16, %s15
      %p148 = scmp.lt.s32.totalorder %s147, 63
      %s149 = scalar_select %p148, %s147, 63
      %s150 = smul.addr %s149, 8
      %s151 = scalar_lea.vmem %s0, %s150
      %p152 = pneg %p36
      %p153 = pneg %p33
      %p154 = pneg %p57
      %p155 = pneg %p54
      %p156 = pneg %p83
      %p157 = pneg %p80
      %s158 = smul.u32 16, %s15
      %p159 = scmp.lt.s32.totalorder %s158, 63
      %s160 = scalar_select %p159, %s158, 63
      %s161 = smul.addr %s160, 8
      %s162 = scalar_lea.vmem %s2, %s161
      %p163 = pneg %p109
      %p164 = pneg %p106
      %p165 = scmp.lt.s32.totalorder %s15, 3
      %s166 = scalar_select %p165, %s15, 3
      %s167 = smul.addr %s166, 2
      %s168 = scalar_lea.vmem %s3, %s167
      %s169 = smul.u32 16, %s15
      %p170 = scmp.lt.s32.totalorder %s169, 63
      %s171 = scalar_select %p170, %s169, 63
      %s172 = smul.addr %s171, 8
      %s173 = scalar_lea.vmem %s0, %s172
      %s174 = smul.u32 16, %s15
      %s175 = smul.u32 16, %s15
      %p176 = scmp.lt.s32.totalorder %s175, 63
      %s177 = scalar_select %p176, %s175, 63
      %s178 = smul.addr %s177, 8
      %s179 = scalar_lea.vmem %s2, %s178
      %s180 = smul.u32 16, %s15
      %p181 = scmp.lt.s32.totalorder %s15, 3
      %s182 = scalar_select %p181, %s15, 3
      %s183 = smul.addr %s182, 2
      %s184 = scalar_lea.vmem %s3, %s183
      %v185 = vld [vmem:[%s173] sm:$0xff]
      %v186 = vld [vmem:[%s173 + $0x8] sm:$0xff]
      %v187 = vld [vmem:[%s173 + $0x10] sm:$0xff]
      %v188 = vld [vmem:[%s173 + $0x18] sm:$0xff]
      %v189 = vld [vmem:[%s173 + $0x20] sm:$0xff]
      %v190 = vld [vmem:[%s173 + $0x28] sm:$0xff]
      %v191 = vld [vmem:[%s173 + $0x30] sm:$0xff]
      %v192 = vld [vmem:[%s173 + $0x38] sm:$0xff]
      %v193 = vld [vmem:[%s173 + $0x40] sm:$0xff]
      %v194 = vld [vmem:[%s173 + $0x48] sm:$0xff]
      %v195 = vld [vmem:[%s173 + $0x50] sm:$0xff]
      %v196 = vld [vmem:[%s173 + $0x58] sm:$0xff]
      %v197 = vld [vmem:[%s173 + $0x60] sm:$0xff]
      %v198 = vld [vmem:[%s173 + $0x68] sm:$0xff]
      %v199 = vld [vmem:[%s173 + $0x70] sm:$0xff]
      %v200 = vld [vmem:[%s173 + $0x78] sm:$0xff]
      %v201 = vld [vmem:[%s1] sm:$0xff]
      %v202 = vld [vmem:[%s1 + $0x8] sm:$0xff]
      %v203 = vld [vmem:[%s1 + $0x10] sm:$0xff]
      %v204 = vld [vmem:[%s1 + $0x18] sm:$0xff]
      %v205 = vld [vmem:[%s1 + $0x20] sm:$0xf]
      %vm206 = vcmask 293888
      %v208 = vsel %vm206, %v185, 0
      %v211 = vsel %vm206, %v186, 0
      %v214 = vsel %vm206, %v187, 0
      %v217 = vsel %vm206, %v188, 0
      %v220 = vsel %vm206, %v189, 0
      %v223 = vsel %vm206, %v190, 0
      %v226 = vsel %vm206, %v191, 0
      %v229 = vsel %vm206, %v192, 0
      %v232 = vsel %vm206, %v193, 0
      %v235 = vsel %vm206, %v194, 0
      %v238 = vsel %vm206, %v195, 0
      %v241 = vsel %vm206, %v196, 0
      %v244 = vsel %vm206, %v197, 0
      %v247 = vsel %vm206, %v198, 0
      %v250 = vsel %vm206, %v199, 0
      %v253 = vsel %vm206, %v200, 0
      %vm255 = vcmask 1043456
      %v257 = vsel %vm255, %v205, 0
      %259 = vmatpush.msra.mxu0 0.0
      %260 = vmatpush.msra.mxu0 0.0
      %261 = vmatpush.msra.mxu0 0.0
      %262 = vmatpush.msra.mxu0 0.0
      %263 = vmatpush.msra.mxu0 0.0
      %264 = vmatpush.msra.mxu0 0.0
      %265 = vmatpush.msra.mxu0 0.0
      %266 = vmatpush.msra.mxu0 0.0
      %267 = vmatpush.msra.mxu0 0.0
      %268 = vmatpush.msra.mxu0 0.0
      %269 = vmatpush.msra.mxu0 0.0
      %270 = vmatpush.msra.mxu0 %v257
      %271 = vmatpush.msra.mxu0 %v204
      %272 = vmatpush.msra.mxu0 %v203
      %273 = vmatpush.msra.mxu0 %v202
      %274 = vmatpush.msra.mxu0 %v201
      %275 = vmatmul.f32.gmra.mxu0 %v208
      %v276 = vpop.f32.mrf.mxu0
      %v277 = vadd.f32 0.0, %v276
      %278 = vmatmul.f32.gmra.mxu0 %v211
      %v279 = vpop.f32.mrf.mxu0
      %v280 = vadd.f32 0.0, %v279
      %281 = vmatmul.f32.gmra.mxu0 %v214
      %v282 = vpop.f32.mrf.mxu0
      %v283 = vadd.f32 0.0, %v282
      %284 = vmatmul.f32.gmra.mxu0 %v217
      %v285 = vpop.f32.mrf.mxu0
      %v286 = vadd.f32 0.0, %v285
      %287 = vmatmul.f32.gmra.mxu0 %v220
      %v288 = vpop.f32.mrf.mxu0
      %v289 = vadd.f32 0.0, %v288
      %290 = vmatmul.f32.gmra.mxu0 %v223
      %v291 = vpop.f32.mrf.mxu0
      %v292 = vadd.f32 0.0, %v291
      %293 = vmatmul.f32.gmra.mxu0 %v226
      %v294 = vpop.f32.mrf.mxu0
      %v295 = vadd.f32 0.0, %v294
      %296 = vmatmul.f32.gmra.mxu0 %v229
      %v297 = vpop.f32.mrf.mxu0
      %v298 = vadd.f32 0.0, %v297
      %299 = vmatmul.f32.gmra.mxu0 %v232
      %v300 = vpop.f32.mrf.mxu0
      %v301 = vadd.f32 0.0, %v300
      %302 = vmatmul.f32.gmra.mxu0 %v235
      %v303 = vpop.f32.mrf.mxu0
      %v304 = vadd.f32 0.0, %v303
      %305 = vmatmul.f32.gmra.mxu0 %v238
      %v306 = vpop.f32.mrf.mxu0
      %v307 = vadd.f32 0.0, %v306
      %308 = vmatmul.f32.gmra.mxu0 %v241
      %v309 = vpop.f32.mrf.mxu0
      %v310 = vadd.f32 0.0, %v309
      %311 = vmatmul.f32.gmra.mxu0 %v244
      %v312 = vpop.f32.mrf.mxu0
      %v313 = vadd.f32 0.0, %v312
      %314 = vmatmul.f32.gmra.mxu0 %v247
      %v315 = vpop.f32.mrf.mxu0
      %v316 = vadd.f32 0.0, %v315
      %317 = vmatmul.f32.gmra.mxu0 %v250
      %v318 = vpop.f32.mrf.mxu0
      %v319 = vadd.f32 0.0, %v318
      %320 = vmatmul.f32.gmra.mxu0 %v253
      %v321 = vpop.f32.mrf.mxu0
      %v322 = vadd.f32 0.0, %v321
      %323 = vdwg.mxu0
      %324 = vst [vmem:[%s179] sm:$0xff] %v277
      %325 = vst [vmem:[%s179 + $0x8] sm:$0xff] %v280
      %326 = vst [vmem:[%s179 + $0x10] sm:$0xff] %v283
      %327 = vst [vmem:[%s179 + $0x18] sm:$0xff] %v286
      %328 = vst [vmem:[%s179 + $0x20] sm:$0xff] %v289
      %329 = vst [vmem:[%s179 + $0x28] sm:$0xff] %v292
      %330 = vst [vmem:[%s179 + $0x30] sm:$0xff] %v295
      %331 = vst [vmem:[%s179 + $0x38] sm:$0xff] %v298
      %332 = vst [vmem:[%s179 + $0x40] sm:$0xff] %v301
      %333 = vst [vmem:[%s179 + $0x48] sm:$0xff] %v304
      %334 = vst [vmem:[%s179 + $0x50] sm:$0xff] %v307
      %335 = vst [vmem:[%s179 + $0x58] sm:$0xff] %v310
      %336 = vst [vmem:[%s179 + $0x60] sm:$0xff] %v313
      %337 = vst [vmem:[%s179 + $0x68] sm:$0xff] %v316
      %338 = vst [vmem:[%s179 + $0x70] sm:$0xff] %v319
      %339 = vst [vmem:[%s179 + $0x78] sm:$0xff] %v322
      %v340 = vadd.f32 %v277, %v280
      %v341 = vadd.f32 %v340, %v283
      %v342 = vadd.f32 %v341, %v286
      %v343 = vadd.f32 %v342, %v289
      %v344 = vadd.f32 %v343, %v292
      %v345 = vadd.f32 %v344, %v295
      %v346 = vadd.f32 %v345, %v298
      %v347 = vadd.f32 %v346, %v301
      %v348 = vadd.f32 %v347, %v304
      %v349 = vadd.f32 %v348, %v307
      %v350 = vadd.f32 %v349, %v310
      %v351 = vadd.f32 %v350, %v313
      %v352 = vadd.f32 %v351, %v316
      %v353 = vadd.f32 %v352, %v319
      %v354 = vadd.f32 %v353, %v322
      %v355 = vrot.slane %v354, 4
      %v356 = vadd.f32 %v354, %v355
      %v357 = vrot.slane %v356, 2
      %v358 = vadd.f32 %v356, %v357
      %v359 = vrot.slane %v358, 1
      %v360 = vadd.f32 %v358, %v359
      %v361 = vmul.f32 %v277, %v277
      %v362 = vmul.f32 %v280, %v280
      %v363 = vmul.f32 %v283, %v283
      %v364 = vmul.f32 %v286, %v286
      %v365 = vmul.f32 %v289, %v289
      %v366 = vmul.f32 %v292, %v292
      %v367 = vmul.f32 %v295, %v295
      %v368 = vmul.f32 %v298, %v298
      %v369 = vmul.f32 %v301, %v301
      %v370 = vmul.f32 %v304, %v304
      %v371 = vmul.f32 %v307, %v307
      %v372 = vmul.f32 %v310, %v310
      %v373 = vmul.f32 %v313, %v313
      %v374 = vmul.f32 %v316, %v316
      %v375 = vmul.f32 %v319, %v319
      %v376 = vmul.f32 %v322, %v322
      %v377 = vadd.f32 %v361, %v362
      %v378 = vadd.f32 %v377, %v363
      %v379 = vadd.f32 %v378, %v364
      %v380 = vadd.f32 %v379, %v365
      %v381 = vadd.f32 %v380, %v366
      %v382 = vadd.f32 %v381, %v367
      %v383 = vadd.f32 %v382, %v368
      %v384 = vadd.f32 %v383, %v369
      %v385 = vadd.f32 %v384, %v370
      %v386 = vadd.f32 %v385, %v371
      %v387 = vadd.f32 %v386, %v372
      %v388 = vadd.f32 %v387, %v373
      %v389 = vadd.f32 %v388, %v374
      %v390 = vadd.f32 %v389, %v375
      %v391 = vadd.f32 %v390, %v376
      %v392 = vrot.slane %v391, 4
      %v393 = vadd.f32 %v391, %v392
      %v394 = vrot.slane %v393, 2
      %v395 = vadd.f32 %v393, %v394
      %v396 = vrot.slane %v395, 1
      %v397 = vadd.f32 %v395, %v396
      %vm398 = vcmask 1040384
      %v399 = vsel %vm398, %v360, %v397
      %400 = vst [vmem:[%s184] sm:$0x3] %v399
      %s401 = smul.u32 16, %s15
      %p402 = scmp.lt.s32.totalorder %s401, 63
      %s403 = scalar_select %p402, %s401, 63
      %s404 = smul.addr %s403, 8
      %s405 = scalar_lea.vmem %s2, %s404
      %p406 = scmp.lt.s32.totalorder %s15, 3
      %s407 = scalar_select %p406, %s15, 3
      %s408 = smul.addr %s407, 2
      %s409 = scalar_lea.vmem %s3, %s408
      // Predicated region
      $region29: #{basic_block_forward.6} parent=27 // pred_check
        %p410 = pneg %p80
      $region30: #{basic_block_forward.6} parent=27 // pred_check_branch
        %412 = sbr.rel (%p410) target = $region32
      $region31: #{basic_block_forward.6} parent=27 // pred_region
        %s413 = smul.u32 16, %s15
      $region32: #{basic_block_forward.6} parent=27 // pred_fallthru
        _
      // Predicated region
      $region33: #{basic_block_forward.6} parent=27 // pred_check
        %p414 = pneg %p106
      $region34: #{basic_block_forward.6} parent=27 // pred_check_branch
        %416 = sbr.rel (%p414) target = $region36
      $region35: #{basic_block_forward.6} parent=27 // pred_region
        _
      $region36: #{basic_block_forward.6} parent=27 // pred_fallthru
        _
    $region28: #{basic_block_forward.6} parent=5 // pred_fallthru
      _
    %p417 = scmp.le.s32.totalorder 2, %s10
    // Predicated region
    $region37: #{basic_block_forward.6} parent=5 // pred_check
      %p418 = pneg %p417
    $region38: #{basic_block_forward.6} parent=5 // pred_check_branch
      %420 = sbr.rel (%p418) target = $region40
    $region39: #{basic_block_forward.6} parent=5 // pred_region
      %s421 = ssub.s32 %s10, 2
      // Predicated region
      $region41: #{basic_block_forward.6} parent=39 // pred_check
        %p422 = pneg %p86
      $region42: #{basic_block_forward.6} parent=39 // pred_check_branch
        %424 = sbr.rel (%p422) target = $region44
      $region43: #{basic_block_forward.6} parent=39 // pred_region
        %s425 = smul.u32 16, %s16
        %p426 = scmp.lt.s32.totalorder %s425, 63
        %s427 = scalar_select %p426, %s425, 63
        %s428 = smul.addr %s427, 8
        %s429 = scalar_lea.vmem %s2, %s428
      $region44: #{basic_block_forward.6} parent=39 // pred_fallthru
        _
      // Predicated region
      $region45: #{basic_block_forward.6} parent=39 // pred_check
        %p430 = pneg %p112
      $region46: #{basic_block_forward.6} parent=39 // pred_check_branch
        %432 = sbr.rel (%p430) target = $region48
      $region47: #{basic_block_forward.6} parent=39 // pred_region
        %p433 = scmp.lt.s32.totalorder %s16, 3
        %s434 = scalar_select %p433, %s16, 3
        %s435 = smul.addr %s434, 2
        %s436 = scalar_lea.vmem %s3, %s435
      $region48: #{basic_block_forward.6} parent=39 // pred_fallthru
        _
    $region40: #{basic_block_forward.6} parent=5 // pred_fallthru
      _
  $region6: #{basic_block_forward.6} parent=0 // loop_footer
    %s14 = sadd.s32 1, %s10
  $region7: #{basic_block_forward.6} parent=0 // loop_footer_branch
    %9 = sbr.rel target = $region3
  $region8: #{basic_block_forward.6} parent=0 // loop_exit
    _

// kernel: basic_block_forward.8
$region0: #{basic_block_forward.8}
  #allocation0 [shape = 'u32[]', space=smem, size = 0x4, offset = 0x4, fixed_abs, tag = 'smem constant byte address 0x4 - core index']
  #allocation1 [shape = 'u32[72,128]{1,0:T(1,128)}', space=vmem, size = 0x9000, scoped, tag = 'internal scratch']
  %s0 = inlined_call_operand.vmem [shape: f32[512,4], index: 0, kind: input, shape index: {}]
  %s1 = inlined_call_operand.vmem [shape: f32[4,128], index: 1, kind: input, shape index: {}]
  %s2 = inlined_call_operand.vmem [shape: f32[512,128], index: 2, kind: output, shape index: {0}]
  %s3 = inlined_call_operand.vmem [shape: f32[4,2,128], index: 3, kind: output, shape index: {1}]
  %4 = xla_tuple %s2, %s3
  %s5 = sld [smem:[#allocation0]]
  $region49: #{basic_block_forward.8} parent=0
    _
  %s7 = ssub.s32 1, %s5
  %s8 = scalar_select 0, %s7, %s5
  loop: start=0, step=1, limit=6
  $region2: #{basic_block_forward.8} parent=0 // loop_pre_header
    _
  $region3: #{basic_block_forward.8} parent=0 // loop_header
    %s10 = sphi 0, %s14
    %p11 = scmp.ge.s32.totalorder %s10, 6
    %s20 = sphi 0, %s22
    %s23 = sphi 0, %s20
    %s24 = sphi 0, %s23
    %s40 = sphi 0, %s24
    %s44 = sphi 0, %s44
    %s46 = sphi 0, %s44
    %s47 = sphi 0, %s46
    %s61 = sphi 0, %s47
    %s67 = sphi 0, %s69
    %s70 = sphi 0, %s67
    %s71 = sphi 0, %s70
    %s87 = sphi 0, %s71
    %s93 = sphi 0, %s95
    %s96 = sphi 0, %s93
    %s97 = sphi 0, %s96
    %s113 = sphi 0, %s97
  $region4: #{basic_block_forward.8} parent=0 // loop_header_branch
    %13 = sbr.rel (%p11) target = $region8
  $region5: #{basic_block_forward.8} parent=0 // loop_body
    %s15 = ssub.s32 %s10, 1
    %s16 = ssub.s32 %s10, 2
    %s17 = sadd.s32 %s10, 1
    %s18 = ssub.s32 %s10, %s17
    %p19 = scmp.eq.s32.totalorder %s18, 0
    %s21 = sadd.s32 %s20, 1
    %s22 = scalar_select %p19, %s20, %s21
    %p25 = pneg %p19
    %p26 = scmp.eq.s32.totalorder %s10, 3
    %p27 = por %p25, %p26
    %p28 = scmp.ne.s32.totalorder %s20, %s23
    %p29 = scmp.eq.s32.totalorder %s10, 0
    %p30 = por %p28, %p29
    %p31 = scmp.ne.s32.totalorder %s20, %s23
    %p32 = scmp.eq.s32.totalorder %s15, 3
    %p33 = por %p31, %p32
    %p34 = scmp.ne.s32.totalorder %s23, %s24
    %p35 = scmp.eq.s32.totalorder %s15, 0
    %p36 = por %p34, %p35
    %p37 = scmp.ne.s32.totalorder %s23, %s24
    %p38 = scmp.eq.s32.totalorder %s16, 3
    %p39 = por %p37, %p38
    %p41 = scmp.ne.s32.totalorder %s24, %s40
    %p42 = scmp.eq.s32.totalorder %s16, 0
    %p43 = por %p41, %p42
    %s45 = sadd.s32 %s44, 1
    %p48 = scmp.eq.s32.totalorder %s10, 3
    %p49 = scmp.ne.s32.totalorder %s44, %s46
    %p50 = scmp.eq.s32.totalorder %s10, 0
    %p51 = por %p49, %p50
    %p52 = scmp.ne.s32.totalorder %s44, %s46
    %p53 = scmp.eq.s32.totalorder %s15, 3
    %p54 = por %p52, %p53
    %p55 = scmp.ne.s32.totalorder %s46, %s47
    %p56 = scmp.eq.s32.totalorder %s15, 0
    %p57 = por %p55, %p56
    %p58 = scmp.ne.s32.totalorder %s46, %s47
    %p59 = scmp.eq.s32.totalorder %s16, 3
    %p60 = por %p58, %p59
    %p62 = scmp.ne.s32.totalorder %s47, %s61
    %p63 = scmp.eq.s32.totalorder %s16, 0
    %p64 = por %p62, %p63
    %s65 = ssub.s32 %s10, %s17
    %p66 = scmp.eq.s32.totalorder %s65, 0
    %s68 = sadd.s32 %s67, 1
    %s69 = scalar_select %p66, %s67, %s68
    %p72 = pneg %p66
    %p73 = scmp.eq.s32.totalorder %s10, 3
    %p74 = por %p72, %p73
    %p75 = scmp.ne.s32.totalorder %s67, %s70
    %p76 = scmp.eq.s32.totalorder %s10, 0
    %p77 = por %p75, %p76
    %p78 = scmp.ne.s32.totalorder %s67, %s70
    %p79 = scmp.eq.s32.totalorder %s15, 3
    %p80 = por %p78, %p79
    %p81 = scmp.ne.s32.totalorder %s70, %s71
    %p82 = scmp.eq.s32.totalorder %s15, 0
    %p83 = por %p81, %p82
    %p84 = scmp.ne.s32.totalorder %s70, %s71
    %p85 = scmp.eq.s32.totalorder %s16, 3
    %p86 = por %p84, %p85
    %p88 = scmp.ne.s32.totalorder %s71, %s87
    %p89 = scmp.eq.s32.totalorder %s16, 0
    %p90 = por %p88, %p89
    %s91 = ssub.s32 %s10, %s17
    %p92 = scmp.eq.s32.totalorder %s91, 0
    %s94 = sadd.s32 %s93, 1
    %s95 = scalar_select %p92, %s93, %s94
    %p98 = pneg %p92
    %p99 = scmp.eq.s32.totalorder %s10, 3
    %p100 = por %p98, %p99
    %p101 = scmp.ne.s32.totalorder %s93, %s96
    %p102 = scmp.eq.s32.totalorder %s10, 0
    %p103 = por %p101, %p102
    %p104 = scmp.ne.s32.totalorder %s93, %s96
    %p105 = scmp.eq.s32.totalorder %s15, 3
    %p106 = por %p104, %p105
    %p107 = scmp.ne.s32.totalorder %s96, %s97
    %p108 = scmp.eq.s32.totalorder %s15, 0
    %p109 = por %p107, %p108
    %p110 = scmp.ne.s32.totalorder %s96, %s97
    %p111 = scmp.eq.s32.totalorder %s16, 3
    %p112 = por %p110, %p111
    %p114 = scmp.ne.s32.totalorder %s97, %s113
    %p115 = scmp.eq.s32.totalorder %s16, 0
    %p116 = por %p114, %p115
    %p117 = scmp.le.s32.totalorder 1, %s10
    %p118 = scmp.lt.s32.totalorder %s10, 5
    %p119 = pnand %p117, %p118
    %p120 = pneg %p119
    // Predicated region
    $region9: #{basic_block_forward.8} parent=5 // pred_check
      _
    $region10: #{basic_block_forward.8} parent=5 // pred_check_branch
      %122 = sbr.rel (%p119) target = $region12
    $region11: #{basic_block_forward.8} parent=5 // pred_region
      %s123 = ssub.s32 %s10, 1
      // Predicated region
      $region13: #{basic_block_forward.8} parent=11 // pred_check
        %p124 = pneg %p57
      $region14: #{basic_block_forward.8} parent=11 // pred_check_branch
        %126 = sbr.rel (%p124) target = $region16
      $region15: #{basic_block_forward.8} parent=11 // pred_region
        _
      $region16: #{basic_block_forward.8} parent=11 // pred_fallthru
        _
    $region12: #{basic_block_forward.8} parent=5 // pred_fallthru
      _
    %p127 = scmp.lt.s32.totalorder %s10, 4
    // Predicated region
    $region17: #{basic_block_forward.8} parent=5 // pred_check
      %p128 = pneg %p127
    $region18: #{basic_block_forward.8} parent=5 // pred_check_branch
      %130 = sbr.rel (%p128) target = $region20
    $region19: #{basic_block_forward.8} parent=5 // pred_region
      // Predicated region
      $region21: #{basic_block_forward.8} parent=19 // pred_check
        %p131 = pneg %p30
      $region22: #{basic_block_forward.8} parent=19 // pred_check_branch
        %133 = sbr.rel (%p131) target = $region24
      $region23: #{basic_block_forward.8} parent=19 // pred_region
        %s134 = smul.u32 16, %s10
        %p135 = scmp.lt.s32.totalorder %s134, 63
        %s136 = scalar_select %p135, %s134, 63
        %s137 = smul.addr %s136, 8
        %s138 = scalar_lea.vmem %s0, %s137
        %s139 = smul.u32 16, %s10
      $region24: #{basic_block_forward.8} parent=19 // pred_fallthru
        _
    $region20: #{basic_block_forward.8} parent=5 // pred_fallthru
      _
    %p140 = scmp.le.s32.totalorder 1, %s10
    %p141 = scmp.lt.s32.totalorder %s10, 5
    %p142 = pnand %p140, %p141
    %p143 = pneg %p142
    // Predicated region
    $region25: #{basic_block_forward.8} parent=5 // pred_check
      _
    $region26: #{basic_block_forward.8} parent=5 // pred_check_branch
      %145 = sbr.rel (%p142) target = $region28
    $region27: #{basic_block_forward.8} parent=5 // pred_region
      %s146 = ssub.s32 %s10, 1
      %s147 = smul.u32 16, %s15
      %p148 = scmp.lt.s32.totalorder %s147, 63
      %s149 = scalar_select %p148, %s147, 63
      %s150 = smul.addr %s149, 8
      %s151 = scalar_lea.vmem %s0, %s150
      %p152 = pneg %p36
      %p153 = pneg %p33
      %p154 = pneg %p57
      %p155 = pneg %p54
      %p156 = pneg %p83
      %p157 = pneg %p80
      %s158 = smul.u32 16, %s15
      %p159 = scmp.lt.s32.totalorder %s158, 63
      %s160 = scalar_select %p159, %s158, 63
      %s161 = smul.addr %s160, 8
      %s162 = scalar_lea.vmem %s2, %s161
      %p163 = pneg %p109
      %p164 = pneg %p106
      %p165 = scmp.lt.s32.totalorder %s15, 3
      %s166 = scalar_select %p165, %s15, 3
      %s167 = smul.addr %s166, 2
      %s168 = scalar_lea.vmem %s3, %s167
      %s169 = smul.u32 16, %s15
      %p170 = scmp.lt.s32.totalorder %s169, 63
      %s171 = scalar_select %p170, %s169, 63
      %s172 = smul.addr %s171, 8
      %s173 = scalar_lea.vmem %s0, %s172
      %s174 = smul.u32 16, %s15
      %s175 = smul.u32 16, %s15
      %p176 = scmp.lt.s32.totalorder %s175, 63
      %s177 = scalar_select %p176, %s175, 63
      %s178 = smul.addr %s177, 8
      %s179 = scalar_lea.vmem %s2, %s178
      %s180 = smul.u32 16, %s15
      %p181 = scmp.lt.s32.totalorder %s15, 3
      %s182 = scalar_select %p181, %s15, 3
      %s183 = smul.addr %s182, 2
      %s184 = scalar_lea.vmem %s3, %s183
      %v185 = vld [vmem:[%s173] sm:$0xff]
      %v186 = vld [vmem:[%s173 + $0x8] sm:$0xff]
      %v187 = vld [vmem:[%s173 + $0x10] sm:$0xff]
      %v188 = vld [vmem:[%s173 + $0x18] sm:$0xff]
      %v189 = vld [vmem:[%s173 + $0x20] sm:$0xff]
      %v190 = vld [vmem:[%s173 + $0x28] sm:$0xff]
      %v191 = vld [vmem:[%s173 + $0x30] sm:$0xff]
      %v192 = vld [vmem:[%s173 + $0x38] sm:$0xff]
      %v193 = vld [vmem:[%s173 + $0x40] sm:$0xff]
      %v194 = vld [vmem:[%s173 + $0x48] sm:$0xff]
      %v195 = vld [vmem:[%s173 + $0x50] sm:$0xff]
      %v196 = vld [vmem:[%s173 + $0x58] sm:$0xff]
      %v197 = vld [vmem:[%s173 + $0x60] sm:$0xff]
      %v198 = vld [vmem:[%s173 + $0x68] sm:$0xff]
      %v199 = vld [vmem:[%s173 + $0x70] sm:$0xff]
      %v200 = vld [vmem:[%s173 + $0x78] sm:$0xff]
      %v201 = vld [vmem:[%s1] sm:$0xf]
      %vm202 = vcmask 31744
      %v204 = vsel %vm202, %v185, 0
      %v207 = vsel %vm202, %v186, 0
      %v210 = vsel %vm202, %v187, 0
      %v213 = vsel %vm202, %v188, 0
      %v216 = vsel %vm202, %v189, 0
      %v219 = vsel %vm202, %v190, 0
      %v222 = vsel %vm202, %v191, 0
      %v225 = vsel %vm202, %v192, 0
      %v228 = vsel %vm202, %v193, 0
      %v231 = vsel %vm202, %v194, 0
      %v234 = vsel %vm202, %v195, 0
      %v237 = vsel %vm202, %v196, 0
      %v240 = vsel %vm202, %v197, 0
      %v243 = vsel %vm202, %v198, 0
      %v246 = vsel %vm202, %v199, 0
      %v249 = vsel %vm202, %v200, 0
      %vm251 = vcmask 1043456
      %v253 = vsel %vm251, %v201, 0
      %255 = vmatpush.msra.mxu0 0.0
      %256 = vmatpush.msra.mxu0 0.0
      %257 = vmatpush.msra.mxu0 0.0
      %258 = vmatpush.msra.mxu0 0.0
      %259 = vmatpush.msra.mxu0 0.0
      %260 = vmatpush.msra.mxu0 0.0
      %261 = vmatpush.msra.mxu0 0.0
      %262 = vmatpush.msra.mxu0 0.0
      %263 = vmatpush.msra.mxu0 0.0
      %264 = vmatpush.msra.mxu0 0.0
      %265 = vmatpush.msra.mxu0 0.0
      %266 = vmatpush.msra.mxu0 0.0
      %267 = vmatpush.msra.mxu0 0.0
      %268 = vmatpush.msra.mxu0 0.0
      %269 = vmatpush.msra.mxu0 0.0
      %270 = vmatpush.msra.mxu0 %v253
      %271 = vmatmul.f32.gmra.mxu0 %v204
      %v272 = vpop.f32.mrf.mxu0
      %v273 = vadd.f32 0.0, %v272
      %274 = vmatmul.f32.gmra.mxu0 %v207
      %v275 = vpop.f32.mrf.mxu0
      %v276 = vadd.f32 0.0, %v275
      %277 = vmatmul.f32.gmra.mxu0 %v210
      %v278 = vpop.f32.mrf.mxu0
      %v279 = vadd.f32 0.0, %v278
      %280 = vmatmul.f32.gmra.mxu0 %v213
      %v281 = vpop.f32.mrf.mxu0
      %v282 = vadd.f32 0.0, %v281
      %283 = vmatmul.f32.gmra.mxu0 %v216
      %v284 = vpop.f32.mrf.mxu0
      %v285 = vadd.f32 0.0, %v284
      %286 = vmatmul.f32.gmra.mxu0 %v219
      %v287 = vpop.f32.mrf.mxu0
      %v288 = vadd.f32 0.0, %v287
      %289 = vmatmul.f32.gmra.mxu0 %v222
      %v290 = vpop.f32.mrf.mxu0
      %v291 = vadd.f32 0.0, %v290
      %292 = vmatmul.f32.gmra.mxu0 %v225
      %v293 = vpop.f32.mrf.mxu0
      %v294 = vadd.f32 0.0, %v293
      %295 = vmatmul.f32.gmra.mxu0 %v228
      %v296 = vpop.f32.mrf.mxu0
      %v297 = vadd.f32 0.0, %v296
      %298 = vmatmul.f32.gmra.mxu0 %v231
      %v299 = vpop.f32.mrf.mxu0
      %v300 = vadd.f32 0.0, %v299
      %301 = vmatmul.f32.gmra.mxu0 %v234
      %v302 = vpop.f32.mrf.mxu0
      %v303 = vadd.f32 0.0, %v302
      %304 = vmatmul.f32.gmra.mxu0 %v237
      %v305 = vpop.f32.mrf.mxu0
      %v306 = vadd.f32 0.0, %v305
      %307 = vmatmul.f32.gmra.mxu0 %v240
      %v308 = vpop.f32.mrf.mxu0
      %v309 = vadd.f32 0.0, %v308
      %310 = vmatmul.f32.gmra.mxu0 %v243
      %v311 = vpop.f32.mrf.mxu0
      %v312 = vadd.f32 0.0, %v311
      %313 = vmatmul.f32.gmra.mxu0 %v246
      %v314 = vpop.f32.mrf.mxu0
      %v315 = vadd.f32 0.0, %v314
      %316 = vmatmul.f32.gmra.mxu0 %v249
      %v317 = vpop.f32.mrf.mxu0
      %v318 = vadd.f32 0.0, %v317
      %319 = vdwg.mxu0
      %320 = vst [vmem:[%s179] sm:$0xff] %v273
      %321 = vst [vmem:[%s179 + $0x8] sm:$0xff] %v276
      %322 = vst [vmem:[%s179 + $0x10] sm:$0xff] %v279
      %323 = vst [vmem:[%s179 + $0x18] sm:$0xff] %v282
      %324 = vst [vmem:[%s179 + $0x20] sm:$0xff] %v285
      %325 = vst [vmem:[%s179 + $0x28] sm:$0xff] %v288
      %326 = vst [vmem:[%s179 + $0x30] sm:$0xff] %v291
      %327 = vst [vmem:[%s179 + $0x38] sm:$0xff] %v294
      %328 = vst [vmem:[%s179 + $0x40] sm:$0xff] %v297
      %329 = vst [vmem:[%s179 + $0x48] sm:$0xff] %v300
      %330 = vst [vmem:[%s179 + $0x50] sm:$0xff] %v303
      %331 = vst [vmem:[%s179 + $0x58] sm:$0xff] %v306
      %332 = vst [vmem:[%s179 + $0x60] sm:$0xff] %v309
      %333 = vst [vmem:[%s179 + $0x68] sm:$0xff] %v312
      %334 = vst [vmem:[%s179 + $0x70] sm:$0xff] %v315
      %335 = vst [vmem:[%s179 + $0x78] sm:$0xff] %v318
      %v336 = vadd.f32 %v273, %v276
      %v337 = vadd.f32 %v336, %v279
      %v338 = vadd.f32 %v337, %v282
      %v339 = vadd.f32 %v338, %v285
      %v340 = vadd.f32 %v339, %v288
      %v341 = vadd.f32 %v340, %v291
      %v342 = vadd.f32 %v341, %v294
      %v343 = vadd.f32 %v342, %v297
      %v344 = vadd.f32 %v343, %v300
      %v345 = vadd.f32 %v344, %v303
      %v346 = vadd.f32 %v345, %v306
      %v347 = vadd.f32 %v346, %v309
      %v348 = vadd.f32 %v347, %v312
      %v349 = vadd.f32 %v348, %v315
      %v350 = vadd.f32 %v349, %v318
      %v351 = vrot.slane %v350, 4
      %v352 = vadd.f32 %v350, %v351
      %v353 = vrot.slane %v352, 2
      %v354 = vadd.f32 %v352, %v353
      %v355 = vrot.slane %v354, 1
      %v356 = vadd.f32 %v354, %v355
      %v357 = vmul.f32 %v273, %v273
      %v358 = vmul.f32 %v276, %v276
      %v359 = vmul.f32 %v279, %v279
      %v360 = vmul.f32 %v282, %v282
      %v361 = vmul.f32 %v285, %v285
      %v362 = vmul.f32 %v288, %v288
      %v363 = vmul.f32 %v291, %v291
      %v364 = vmul.f32 %v294, %v294
      %v365 = vmul.f32 %v297, %v297
      %v366 = vmul.f32 %v300, %v300
      %v367 = vmul.f32 %v303, %v303
      %v368 = vmul.f32 %v306, %v306
      %v369 = vmul.f32 %v309, %v309
      %v370 = vmul.f32 %v312, %v312
      %v371 = vmul.f32 %v315, %v315
      %v372 = vmul.f32 %v318, %v318
      %v373 = vadd.f32 %v357, %v358
      %v374 = vadd.f32 %v373, %v359
      %v375 = vadd.f32 %v374, %v360
      %v376 = vadd.f32 %v375, %v361
      %v377 = vadd.f32 %v376, %v362
      %v378 = vadd.f32 %v377, %v363
      %v379 = vadd.f32 %v378, %v364
      %v380 = vadd.f32 %v379, %v365
      %v381 = vadd.f32 %v380, %v366
      %v382 = vadd.f32 %v381, %v367
      %v383 = vadd.f32 %v382, %v368
      %v384 = vadd.f32 %v383, %v369
      %v385 = vadd.f32 %v384, %v370
      %v386 = vadd.f32 %v385, %v371
      %v387 = vadd.f32 %v386, %v372
      %v388 = vrot.slane %v387, 4
      %v389 = vadd.f32 %v387, %v388
      %v390 = vrot.slane %v389, 2
      %v391 = vadd.f32 %v389, %v390
      %v392 = vrot.slane %v391, 1
      %v393 = vadd.f32 %v391, %v392
      %vm394 = vcmask 1040384
      %v395 = vsel %vm394, %v356, %v393
      %396 = vst [vmem:[%s184] sm:$0x3] %v395
      %s397 = smul.u32 16, %s15
      %p398 = scmp.lt.s32.totalorder %s397, 63
      %s399 = scalar_select %p398, %s397, 63
      %s400 = smul.addr %s399, 8
      %s401 = scalar_lea.vmem %s2, %s400
      %p402 = scmp.lt.s32.totalorder %s15, 3
      %s403 = scalar_select %p402, %s15, 3
      %s404 = smul.addr %s403, 2
      %s405 = scalar_lea.vmem %s3, %s404
      // Predicated region
      $region29: #{basic_block_forward.8} parent=27 // pred_check
        %p406 = pneg %p80
      $region30: #{basic_block_forward.8} parent=27 // pred_check_branch
        %408 = sbr.rel (%p406) target = $region32
      $region31: #{basic_block_forward.8} parent=27 // pred_region
        %s409 = smul.u32 16, %s15
      $region32: #{basic_block_forward.8} parent=27 // pred_fallthru
        _
      // Predicated region
      $region33: #{basic_block_forward.8} parent=27 // pred_check
        %p410 = pneg %p106
      $region34: #{basic_block_forward.8} parent=27 // pred_check_branch
        %412 = sbr.rel (%p410) target = $region36
      $region35: #{basic_block_forward.8} parent=27 // pred_region
        _
      $region36: #{basic_block_forward.8} parent=27 // pred_fallthru
        _
    $region28: #{basic_block_forward.8} parent=5 // pred_fallthru
      _
    %p413 = scmp.le.s32.totalorder 2, %s10
    // Predicated region
    $region37: #{basic_block_forward.8} parent=5 // pred_check
      %p414 = pneg %p413
    $region38: #{basic_block_forward.8} parent=5 // pred_check_branch
      %416 = sbr.rel (%p414) target = $region40
    $region39: #{basic_block_forward.8} parent=5 // pred_region
      %s417 = ssub.s32 %s10, 2
      // Predicated region
      $region41: #{basic_block_forward.8} parent=39 // pred_check
        %p418 = pneg %p86
      $region42: #{basic_block_forward.8} parent=39 // pred_check_branch
        %420 = sbr.rel (%p418) target = $region44
      $region43: #{basic_block_forward.8} parent=39 // pred_region
        %s421 = smul.u32 16, %s16
        %p422 = scmp.lt.s32.totalorder %s421, 63
        %s423 = scalar_select %p422, %s421, 63
        %s424 = smul.addr %s423, 8
        %s425 = scalar_lea.vmem %s2, %s424
      $region44: #{basic_block_forward.8} parent=39 // pred_fallthru
        _
      // Predicated region
      $region45: #{basic_block_forward.8} parent=39 // pred_check
        %p426 = pneg %p112
      $region46: #{basic_block_forward.8} parent=39 // pred_check_branch
        %428 = sbr.rel (%p426) target = $region48
      $region47: #{basic_block_forward.8} parent=39 // pred_region
        %p429 = scmp.lt.s32.totalorder %s16, 3
        %s430 = scalar_select %p429, %s16, 3
        %s431 = smul.addr %s430, 2
        %s432 = scalar_lea.vmem %s3, %s431
      $region48: #{basic_block_forward.8} parent=39 // pred_fallthru
        _
    $region40: #{basic_block_forward.8} parent=5 // pred_fallthru
      _
  $region6: #{basic_block_forward.8} parent=0 // loop_footer
    %s14 = sadd.s32 1, %s10
  $region7: #{basic_block_forward.8} parent=0 // loop_footer_branch
    %9 = sbr.rel target = $region3
  $region8: #{basic_block_forward.8} parent=0 // loop_exit
    _

// kernel: basic_block_forward.10
$region0: #{basic_block_forward.10}
  #allocation0 [shape = 'u32[]', space=smem, size = 0x4, offset = 0x4, fixed_abs, tag = 'smem constant byte address 0x4 - core index']
  #allocation1 [shape = 'u32[72,128]{1,0:T(1,128)}', space=vmem, size = 0x9000, scoped, tag = 'internal scratch']
  %s0 = inlined_call_operand.vmem [shape: f32[512,72], index: 0, kind: input, shape index: {}]
  %s1 = inlined_call_operand.vmem [shape: f32[72,128], index: 1, kind: input, shape index: {}]
  %s2 = inlined_call_operand.vmem [shape: f32[512,128], index: 2, kind: output, shape index: {0}]
  %s3 = inlined_call_operand.vmem [shape: f32[4,2,128], index: 3, kind: output, shape index: {1}]
  %4 = xla_tuple %s2, %s3
  %s5 = sld [smem:[#allocation0]]
  $region49: #{basic_block_forward.10} parent=0
    _
  %s7 = ssub.s32 1, %s5
  %s8 = scalar_select 0, %s7, %s5
  loop: start=0, step=1, limit=6
  $region2: #{basic_block_forward.10} parent=0 // loop_pre_header
    _
  $region3: #{basic_block_forward.10} parent=0 // loop_header
    %s10 = sphi 0, %s14
    %p11 = scmp.ge.s32.totalorder %s10, 6
    %s20 = sphi 0, %s22
    %s23 = sphi 0, %s20
    %s24 = sphi 0, %s23
    %s40 = sphi 0, %s24
    %s44 = sphi 0, %s44
    %s46 = sphi 0, %s44
    %s47 = sphi 0, %s46
    %s61 = sphi 0, %s47
    %s67 = sphi 0, %s69
    %s70 = sphi 0, %s67
    %s71 = sphi 0, %s70
    %s87 = sphi 0, %s71
    %s93 = sphi 0, %s95
    %s96 = sphi 0, %s93
    %s97 = sphi 0, %s96
    %s113 = sphi 0, %s97
  $region4: #{basic_block_forward.10} parent=0 // loop_header_branch
    %13 = sbr.rel (%p11) target = $region8
  $region5: #{basic_block_forward.10} parent=0 // loop_body
    %s15 = ssub.s32 %s10, 1
    %s16 = ssub.s32 %s10, 2
    %s17 = sadd.s32 %s10, 1
    %s18 = ssub.s32 %s10, %s17
    %p19 = scmp.eq.s32.totalorder %s18, 0
    %s21 = sadd.s32 %s20, 1
    %s22 = scalar_select %p19, %s20, %s21
    %p25 = pneg %p19
    %p26 = scmp.eq.s32.totalorder %s10, 3
    %p27 = por %p25, %p26
    %p28 = scmp.ne.s32.totalorder %s20, %s23
    %p29 = scmp.eq.s32.totalorder %s10, 0
    %p30 = por %p28, %p29
    %p31 = scmp.ne.s32.totalorder %s20, %s23
    %p32 = scmp.eq.s32.totalorder %s15, 3
    %p33 = por %p31, %p32
    %p34 = scmp.ne.s32.totalorder %s23, %s24
    %p35 = scmp.eq.s32.totalorder %s15, 0
    %p36 = por %p34, %p35
    %p37 = scmp.ne.s32.totalorder %s23, %s24
    %p38 = scmp.eq.s32.totalorder %s16, 3
    %p39 = por %p37, %p38
    %p41 = scmp.ne.s32.totalorder %s24, %s40
    %p42 = scmp.eq.s32.totalorder %s16, 0
    %p43 = por %p41, %p42
    %s45 = sadd.s32 %s44, 1
    %p48 = scmp.eq.s32.totalorder %s10, 3
    %p49 = scmp.ne.s32.totalorder %s44, %s46
    %p50 = scmp.eq.s32.totalorder %s10, 0
    %p51 = por %p49, %p50
    %p52 = scmp.ne.s32.totalorder %s44, %s46
    %p53 = scmp.eq.s32.totalorder %s15, 3
    %p54 = por %p52, %p53
    %p55 = scmp.ne.s32.totalorder %s46, %s47
    %p56 = scmp.eq.s32.totalorder %s15, 0
    %p57 = por %p55, %p56
    %p58 = scmp.ne.s32.totalorder %s46, %s47
    %p59 = scmp.eq.s32.totalorder %s16, 3
    %p60 = por %p58, %p59
    %p62 = scmp.ne.s32.totalorder %s47, %s61
    %p63 = scmp.eq.s32.totalorder %s16, 0
    %p64 = por %p62, %p63
    %s65 = ssub.s32 %s10, %s17
    %p66 = scmp.eq.s32.totalorder %s65, 0
    %s68 = sadd.s32 %s67, 1
    %s69 = scalar_select %p66, %s67, %s68
    %p72 = pneg %p66
    %p73 = scmp.eq.s32.totalorder %s10, 3
    %p74 = por %p72, %p73
    %p75 = scmp.ne.s32.totalorder %s67, %s70
    %p76 = scmp.eq.s32.totalorder %s10, 0
    %p77 = por %p75, %p76
    %p78 = scmp.ne.s32.totalorder %s67, %s70
    %p79 = scmp.eq.s32.totalorder %s15, 3
    %p80 = por %p78, %p79
    %p81 = scmp.ne.s32.totalorder %s70, %s71
    %p82 = scmp.eq.s32.totalorder %s15, 0
    %p83 = por %p81, %p82
    %p84 = scmp.ne.s32.totalorder %s70, %s71
    %p85 = scmp.eq.s32.totalorder %s16, 3
    %p86 = por %p84, %p85
    %p88 = scmp.ne.s32.totalorder %s71, %s87
    %p89 = scmp.eq.s32.totalorder %s16, 0
    %p90 = por %p88, %p89
    %s91 = ssub.s32 %s10, %s17
    %p92 = scmp.eq.s32.totalorder %s91, 0
    %s94 = sadd.s32 %s93, 1
    %s95 = scalar_select %p92, %s93, %s94
    %p98 = pneg %p92
    %p99 = scmp.eq.s32.totalorder %s10, 3
    %p100 = por %p98, %p99
    %p101 = scmp.ne.s32.totalorder %s93, %s96
    %p102 = scmp.eq.s32.totalorder %s10, 0
    %p103 = por %p101, %p102
    %p104 = scmp.ne.s32.totalorder %s93, %s96
    %p105 = scmp.eq.s32.totalorder %s15, 3
    %p106 = por %p104, %p105
    %p107 = scmp.ne.s32.totalorder %s96, %s97
    %p108 = scmp.eq.s32.totalorder %s15, 0
    %p109 = por %p107, %p108
    %p110 = scmp.ne.s32.totalorder %s96, %s97
    %p111 = scmp.eq.s32.totalorder %s16, 3
    %p112 = por %p110, %p111
    %p114 = scmp.ne.s32.totalorder %s97, %s113
    %p115 = scmp.eq.s32.totalorder %s16, 0
    %p116 = por %p114, %p115
    %p117 = scmp.le.s32.totalorder 1, %s10
    %p118 = scmp.lt.s32.totalorder %s10, 5
    %p119 = pnand %p117, %p118
    %p120 = pneg %p119
    // Predicated region
    $region9: #{basic_block_forward.10} parent=5 // pred_check
      _
    $region10: #{basic_block_forward.10} parent=5 // pred_check_branch
      %122 = sbr.rel (%p119) target = $region12
    $region11: #{basic_block_forward.10} parent=5 // pred_region
      %s123 = ssub.s32 %s10, 1
      // Predicated region
      $region13: #{basic_block_forward.10} parent=11 // pred_check
        %p124 = pneg %p57
      $region14: #{basic_block_forward.10} parent=11 // pred_check_branch
        %126 = sbr.rel (%p124) target = $region16
      $region15: #{basic_block_forward.10} parent=11 // pred_region
        _
      $region16: #{basic_block_forward.10} parent=11 // pred_fallthru
        _
    $region12: #{basic_block_forward.10} parent=5 // pred_fallthru
      _
    %p127 = scmp.lt.s32.totalorder %s10, 4
    // Predicated region
    $region17: #{basic_block_forward.10} parent=5 // pred_check
      %p128 = pneg %p127
    $region18: #{basic_block_forward.10} parent=5 // pred_check_branch
      %130 = sbr.rel (%p128) target = $region20
    $region19: #{basic_block_forward.10} parent=5 // pred_region
      // Predicated region
      $region21: #{basic_block_forward.10} parent=19 // pred_check
        %p131 = pneg %p30
      $region22: #{basic_block_forward.10} parent=19 // pred_check_branch
        %133 = sbr.rel (%p131) target = $region24
      $region23: #{basic_block_forward.10} parent=19 // pred_region
        %s134 = smul.u32 16, %s10
        %p135 = scmp.lt.s32.totalorder %s134, 63
        %s136 = scalar_select %p135, %s134, 63
        %s137 = smul.addr %s136, 8
        %s138 = scalar_lea.vmem %s0, %s137
        %s139 = smul.u32 16, %s10
      $region24: #{basic_block_forward.10} parent=19 // pred_fallthru
        _
    $region20: #{basic_block_forward.10} parent=5 // pred_fallthru
      _
    %p140 = scmp.le.s32.totalorder 1, %s10
    %p141 = scmp.lt.s32.totalorder %s10, 5
    %p142 = pnand %p140, %p141
    %p143 = pneg %p142
    // Predicated region
    $region25: #{basic_block_forward.10} parent=5 // pred_check
      _
    $region26: #{basic_block_forward.10} parent=5 // pred_check_branch
      %145 = sbr.rel (%p142) target = $region28
    $region27: #{basic_block_forward.10} parent=5 // pred_region
      %s146 = ssub.s32 %s10, 1
      %s147 = smul.u32 16, %s15
      %p148 = scmp.lt.s32.totalorder %s147, 63
      %s149 = scalar_select %p148, %s147, 63
      %s150 = smul.addr %s149, 8
      %s151 = scalar_lea.vmem %s0, %s150
      %p152 = pneg %p36
      %p153 = pneg %p33
      %p154 = pneg %p57
      %p155 = pneg %p54
      %p156 = pneg %p83
      %p157 = pneg %p80
      %s158 = smul.u32 16, %s15
      %p159 = scmp.lt.s32.totalorder %s158, 63
      %s160 = scalar_select %p159, %s158, 63
      %s161 = smul.addr %s160, 8
      %s162 = scalar_lea.vmem %s2, %s161
      %p163 = pneg %p109
      %p164 = pneg %p106
      %p165 = scmp.lt.s32.totalorder %s15, 3
      %s166 = scalar_select %p165, %s15, 3
      %s167 = smul.addr %s166, 2
      %s168 = scalar_lea.vmem %s3, %s167
      %s169 = smul.u32 16, %s15
      %p170 = scmp.lt.s32.totalorder %s169, 63
      %s171 = scalar_select %p170, %s169, 63
      %s172 = smul.addr %s171, 8
      %s173 = scalar_lea.vmem %s0, %s172
      %s174 = smul.u32 16, %s15
      %s175 = smul.u32 16, %s15
      %p176 = scmp.lt.s32.totalorder %s175, 63
      %s177 = scalar_select %p176, %s175, 63
      %s178 = smul.addr %s177, 8
      %s179 = scalar_lea.vmem %s2, %s178
      %s180 = smul.u32 16, %s15
      %p181 = scmp.lt.s32.totalorder %s15, 3
      %s182 = scalar_select %p181, %s15, 3
      %s183 = smul.addr %s182, 2
      %s184 = scalar_lea.vmem %s3, %s183
      %v185 = vld [vmem:[%s173] sm:$0xff]
      %v186 = vld [vmem:[%s173 + $0x8] sm:$0xff]
      %v187 = vld [vmem:[%s173 + $0x10] sm:$0xff]
      %v188 = vld [vmem:[%s173 + $0x18] sm:$0xff]
      %v189 = vld [vmem:[%s173 + $0x20] sm:$0xff]
      %v190 = vld [vmem:[%s173 + $0x28] sm:$0xff]
      %v191 = vld [vmem:[%s173 + $0x30] sm:$0xff]
      %v192 = vld [vmem:[%s173 + $0x38] sm:$0xff]
      %v193 = vld [vmem:[%s173 + $0x40] sm:$0xff]
      %v194 = vld [vmem:[%s173 + $0x48] sm:$0xff]
      %v195 = vld [vmem:[%s173 + $0x50] sm:$0xff]
      %v196 = vld [vmem:[%s173 + $0x58] sm:$0xff]
      %v197 = vld [vmem:[%s173 + $0x60] sm:$0xff]
      %v198 = vld [vmem:[%s173 + $0x68] sm:$0xff]
      %v199 = vld [vmem:[%s173 + $0x70] sm:$0xff]
      %v200 = vld [vmem:[%s173 + $0x78] sm:$0xff]
      %v201 = vld [vmem:[%s1] sm:$0xff]
      %v202 = vld [vmem:[%s1 + $0x8] sm:$0xff]
      %v203 = vld [vmem:[%s1 + $0x10] sm:$0xff]
      %v204 = vld [vmem:[%s1 + $0x18] sm:$0xff]
      %v205 = vld [vmem:[%s1 + $0x20] sm:$0xff]
      %v206 = vld [vmem:[%s1 + $0x28] sm:$0xff]
      %v207 = vld [vmem:[%s1 + $0x30] sm:$0xff]
      %v208 = vld [vmem:[%s1 + $0x38] sm:$0xff]
      %v209 = vld [vmem:[%s1 + $0x40] sm:$0xff]
      %vm210 = vcmask 588800
      %v212 = vsel %vm210, %v185, 0
      %v215 = vsel %vm210, %v186, 0
      %v218 = vsel %vm210, %v187, 0
      %v221 = vsel %vm210, %v188, 0
      %v224 = vsel %vm210, %v189, 0
      %v227 = vsel %vm210, %v190, 0
      %v230 = vsel %vm210, %v191, 0
      %v233 = vsel %vm210, %v192, 0
      %v236 = vsel %vm210, %v193, 0
      %v239 = vsel %vm210, %v194, 0
      %v242 = vsel %vm210, %v195, 0
      %v245 = vsel %vm210, %v196, 0
      %v248 = vsel %vm210, %v197, 0
      %v251 = vsel %vm210, %v198, 0
      %v254 = vsel %vm210, %v199, 0
      %v257 = vsel %vm210, %v200, 0
      %259 = vmatpush.msra.mxu0 0.0
      %260 = vmatpush.msra.mxu0 0.0
      %261 = vmatpush.msra.mxu0 0.0
      %262 = vmatpush.msra.mxu0 0.0
      %263 = vmatpush.msra.mxu0 0.0
      %264 = vmatpush.msra.mxu0 0.0
      %265 = vmatpush.msra.mxu0 0.0
      %266 = vmatpush.msra.mxu0 %v209
      %267 = vmatpush.msra.mxu0 %v208
      %268 = vmatpush.msra.mxu0 %v207
      %269 = vmatpush.msra.mxu0 %v206
      %270 = vmatpush.msra.mxu0 %v205
      %271 = vmatpush.msra.mxu0 %v204
      %272 = vmatpush.msra.mxu0 %v203
      %273 = vmatpush.msra.mxu0 %v202
      %274 = vmatpush.msra.mxu0 %v201
      %275 = vmatmul.f32.gmra.mxu0 %v212
      %v276 = vpop.f32.mrf.mxu0
      %v277 = vadd.f32 0.0, %v276
      %278 = vmatmul.f32.gmra.mxu0 %v215
      %v279 = vpop.f32.mrf.mxu0
      %v280 = vadd.f32 0.0, %v279
      %281 = vmatmul.f32.gmra.mxu0 %v218
      %v282 = vpop.f32.mrf.mxu0
      %v283 = vadd.f32 0.0, %v282
      %284 = vmatmul.f32.gmra.mxu0 %v221
      %v285 = vpop.f32.mrf.mxu0
      %v286 = vadd.f32 0.0, %v285
      %287 = vmatmul.f32.gmra.mxu0 %v224
      %v288 = vpop.f32.mrf.mxu0
      %v289 = vadd.f32 0.0, %v288
      %290 = vmatmul.f32.gmra.mxu0 %v227
      %v291 = vpop.f32.mrf.mxu0
      %v292 = vadd.f32 0.0, %v291
      %293 = vmatmul.f32.gmra.mxu0 %v230
      %v294 = vpop.f32.mrf.mxu0
      %v295 = vadd.f32 0.0, %v294
      %296 = vmatmul.f32.gmra.mxu0 %v233
      %v297 = vpop.f32.mrf.mxu0
      %v298 = vadd.f32 0.0, %v297
      %299 = vmatmul.f32.gmra.mxu0 %v236
      %v300 = vpop.f32.mrf.mxu0
      %v301 = vadd.f32 0.0, %v300
      %302 = vmatmul.f32.gmra.mxu0 %v239
      %v303 = vpop.f32.mrf.mxu0
      %v304 = vadd.f32 0.0, %v303
      %305 = vmatmul.f32.gmra.mxu0 %v242
      %v306 = vpop.f32.mrf.mxu0
      %v307 = vadd.f32 0.0, %v306
      %308 = vmatmul.f32.gmra.mxu0 %v245
      %v309 = vpop.f32.mrf.mxu0
      %v310 = vadd.f32 0.0, %v309
      %311 = vmatmul.f32.gmra.mxu0 %v248
      %v312 = vpop.f32.mrf.mxu0
      %v313 = vadd.f32 0.0, %v312
      %314 = vmatmul.f32.gmra.mxu0 %v251
      %v315 = vpop.f32.mrf.mxu0
      %v316 = vadd.f32 0.0, %v315
      %317 = vmatmul.f32.gmra.mxu0 %v254
      %v318 = vpop.f32.mrf.mxu0
      %v319 = vadd.f32 0.0, %v318
      %320 = vmatmul.f32.gmra.mxu0 %v257
      %v321 = vpop.f32.mrf.mxu0
      %v322 = vadd.f32 0.0, %v321
      %323 = vdwg.mxu0
      %324 = vst [vmem:[%s179] sm:$0xff] %v277
      %325 = vst [vmem:[%s179 + $0x8] sm:$0xff] %v280
      %326 = vst [vmem:[%s179 + $0x10] sm:$0xff] %v283
      %327 = vst [vmem:[%s179 + $0x18] sm:$0xff] %v286
      %328 = vst [vmem:[%s179 + $0x20] sm:$0xff] %v289
      %329 = vst [vmem:[%s179 + $0x28] sm:$0xff] %v292
      %330 = vst [vmem:[%s179 + $0x30] sm:$0xff] %v295
      %331 = vst [vmem:[%s179 + $0x38] sm:$0xff] %v298
      %332 = vst [vmem:[%s179 + $0x40] sm:$0xff] %v301
      %333 = vst [vmem:[%s179 + $0x48] sm:$0xff] %v304
      %334 = vst [vmem:[%s179 + $0x50] sm:$0xff] %v307
      %335 = vst [vmem:[%s179 + $0x58] sm:$0xff] %v310
      %336 = vst [vmem:[%s179 + $0x60] sm:$0xff] %v313
      %337 = vst [vmem:[%s179 + $0x68] sm:$0xff] %v316
      %338 = vst [vmem:[%s179 + $0x70] sm:$0xff] %v319
      %339 = vst [vmem:[%s179 + $0x78] sm:$0xff] %v322
      %v340 = vadd.f32 %v277, %v280
      %v341 = vadd.f32 %v340, %v283
      %v342 = vadd.f32 %v341, %v286
      %v343 = vadd.f32 %v342, %v289
      %v344 = vadd.f32 %v343, %v292
      %v345 = vadd.f32 %v344, %v295
      %v346 = vadd.f32 %v345, %v298
      %v347 = vadd.f32 %v346, %v301
      %v348 = vadd.f32 %v347, %v304
      %v349 = vadd.f32 %v348, %v307
      %v350 = vadd.f32 %v349, %v310
      %v351 = vadd.f32 %v350, %v313
      %v352 = vadd.f32 %v351, %v316
      %v353 = vadd.f32 %v352, %v319
      %v354 = vadd.f32 %v353, %v322
      %v355 = vrot.slane %v354, 4
      %v356 = vadd.f32 %v354, %v355
      %v357 = vrot.slane %v356, 2
      %v358 = vadd.f32 %v356, %v357
      %v359 = vrot.slane %v358, 1
      %v360 = vadd.f32 %v358, %v359
      %v361 = vmul.f32 %v277, %v277
      %v362 = vmul.f32 %v280, %v280
      %v363 = vmul.f32 %v283, %v283
      %v364 = vmul.f32 %v286, %v286
      %v365 = vmul.f32 %v289, %v289
      %v366 = vmul.f32 %v292, %v292
      %v367 = vmul.f32 %v295, %v295
      %v368 = vmul.f32 %v298, %v298
      %v369 = vmul.f32 %v301, %v301
      %v370 = vmul.f32 %v304, %v304
      %v371 = vmul.f32 %v307, %v307
      %v372 = vmul.f32 %v310, %v310
      %v373 = vmul.f32 %v313, %v313
      %v374 = vmul.f32 %v316, %v316
      %v375 = vmul.f32 %v319, %v319
      %v376 = vmul.f32 %v322, %v322
      %v377 = vadd.f32 %v361, %v362
      %v378 = vadd.f32 %v377, %v363
      %v379 = vadd.f32 %v378, %v364
      %v380 = vadd.f32 %v379, %v365
      %v381 = vadd.f32 %v380, %v366
      %v382 = vadd.f32 %v381, %v367
      %v383 = vadd.f32 %v382, %v368
      %v384 = vadd.f32 %v383, %v369
      %v385 = vadd.f32 %v384, %v370
      %v386 = vadd.f32 %v385, %v371
      %v387 = vadd.f32 %v386, %v372
      %v388 = vadd.f32 %v387, %v373
      %v389 = vadd.f32 %v388, %v374
      %v390 = vadd.f32 %v389, %v375
      %v391 = vadd.f32 %v390, %v376
      %v392 = vrot.slane %v391, 4
      %v393 = vadd.f32 %v391, %v392
      %v394 = vrot.slane %v393, 2
      %v395 = vadd.f32 %v393, %v394
      %v396 = vrot.slane %v395, 1
      %v397 = vadd.f32 %v395, %v396
      %vm398 = vcmask 1040384
      %v399 = vsel %vm398, %v360, %v397
      %400 = vst [vmem:[%s184] sm:$0x3] %v399
      %s401 = smul.u32 16, %s15
      %p402 = scmp.lt.s32.totalorder %s401, 63
      %s403 = scalar_select %p402, %s401, 63
      %s404 = smul.addr %s403, 8
      %s405 = scalar_lea.vmem %s2, %s404
      %p406 = scmp.lt.s32.totalorder %s15, 3
      %s407 = scalar_select %p406, %s15, 3
      %s408 = smul.addr %s407, 2
      %s409 = scalar_lea.vmem %s3, %s408
      // Predicated region
      $region29: #{basic_block_forward.10} parent=27 // pred_check
        %p410 = pneg %p80
      $region30: #{basic_block_forward.10} parent=27 // pred_check_branch
        %412 = sbr.rel (%p410) target = $region32
      $region31: #{basic_block_forward.10} parent=27 // pred_region
        %s413 = smul.u32 16, %s15
      $region32: #{basic_block_forward.10} parent=27 // pred_fallthru
        _
      // Predicated region
      $region33: #{basic_block_forward.10} parent=27 // pred_check
        %p414 = pneg %p106
      $region34: #{basic_block_forward.10} parent=27 // pred_check_branch
        %416 = sbr.rel (%p414) target = $region36
      $region35: #{basic_block_forward.10} parent=27 // pred_region
        _
      $region36: #{basic_block_forward.10} parent=27 // pred_fallthru
        _
    $region28: #{basic_block_forward.10} parent=5 // pred_fallthru
      _
    %p417 = scmp.le.s32.totalorder 2, %s10
    // Predicated region
    $region37: #{basic_block_forward.10} parent=5 // pred_check
      %p418 = pneg %p417
    $region38: #{basic_block_forward.10} parent=5 // pred_check_branch
      %420 = sbr.rel (%p418) target = $region40
    $region39: #{basic_block_forward.10} parent=5 // pred_region
      %s421 = ssub.s32 %s10, 2
      // Predicated region
      $region41: #{basic_block_forward.10} parent=39 // pred_check
        %p422 = pneg %p86
      $region42: #{basic_block_forward.10} parent=39 // pred_check_branch
        %424 = sbr.rel (%p422) target = $region44
      $region43: #{basic_block_forward.10} parent=39 // pred_region
        %s425 = smul.u32 16, %s16
        %p426 = scmp.lt.s32.totalorder %s425, 63
        %s427 = scalar_select %p426, %s425, 63
        %s428 = smul.addr %s427, 8
        %s429 = scalar_lea.vmem %s2, %s428
      $region44: #{basic_block_forward.10} parent=39 // pred_fallthru
        _
      // Predicated region
      $region45: #{basic_block_forward.10} parent=39 // pred_check
        %p430 = pneg %p112
      $region46: #{basic_block_forward.10} parent=39 // pred_check_branch
        %432 = sbr.rel (%p430) target = $region48
      $region47: #{basic_block_forward.10} parent=39 // pred_region
        %p433 = scmp.lt.s32.totalorder %s16, 3
        %s434 = scalar_select %p433, %s16, 3
        %s435 = smul.addr %s434, 2
        %s436 = scalar_lea.vmem %s3, %s435
      $region48: #{basic_block_forward.10} parent=39 // pred_fallthru
        _
    $region40: #{basic_block_forward.10} parent=5 // pred_fallthru
      _
  $region6: #{basic_block_forward.10} parent=0 // loop_footer
    %s14 = sadd.s32 1, %s10
  $region7: #{basic_block_forward.10} parent=0 // loop_footer_branch
    %9 = sbr.rel target = $region3
  $region8: #{basic_block_forward.10} parent=0 // loop_exit
    _

// kernel: basic_block_forward.9
$region0: #{basic_block_forward.9}
  #allocation0 [shape = 'u32[]', space=smem, size = 0x4, offset = 0x4, fixed_abs, tag = 'smem constant byte address 0x4 - core index']
  #allocation1 [shape = 'u32[72,128]{1,0:T(1,128)}', space=vmem, size = 0x9000, scoped, tag = 'internal scratch']
  %s0 = inlined_call_operand.vmem [shape: f32[512,128], index: 0, kind: input, shape index: {}]
  %s1 = inlined_call_operand.vmem [shape: f32[1,128], index: 1, kind: input, shape index: {}]
  %s2 = inlined_call_operand.vmem [shape: f32[1,128], index: 2, kind: input, shape index: {}]
  %s3 = inlined_call_operand.vmem [shape: f32[512,128], index: 3, kind: output, shape index: {}]
  %s4 = sld [smem:[#allocation0]]
  $region45: #{basic_block_forward.9} parent=0
    _
  %s6 = ssub.s32 1, %s4
  %s7 = scalar_select 0, %s6, %s4
  loop: start=0, step=1, limit=6
  $region2: #{basic_block_forward.9} parent=0 // loop_pre_header
    _
  $region3: #{basic_block_forward.9} parent=0 // loop_header
    %s9 = sphi 0, %s13
    %p10 = scmp.ge.s32.totalorder %s9, 6
    %s19 = sphi 0, %s21
    %s22 = sphi 0, %s19
    %s23 = sphi 0, %s22
    %s39 = sphi 0, %s23
    %s43 = sphi 0, %s43
    %s45 = sphi 0, %s43
    %s46 = sphi 0, %s45
    %s60 = sphi 0, %s46
    %s64 = sphi 0, %s64
    %s66 = sphi 0, %s64
    %s67 = sphi 0, %s66
    %s81 = sphi 0, %s67
    %s87 = sphi 0, %s89
    %s90 = sphi 0, %s87
    %s91 = sphi 0, %s90
    %s107 = sphi 0, %s91
  $region4: #{basic_block_forward.9} parent=0 // loop_header_branch
    %12 = sbr.rel (%p10) target = $region8
  $region5: #{basic_block_forward.9} parent=0 // loop_body
    %s14 = ssub.s32 %s9, 1
    %s15 = ssub.s32 %s9, 2
    %s16 = sadd.s32 %s9, 1
    %s17 = ssub.s32 %s9, %s16
    %p18 = scmp.eq.s32.totalorder %s17, 0
    %s20 = sadd.s32 %s19, 1
    %s21 = scalar_select %p18, %s19, %s20
    %p24 = pneg %p18
    %p25 = scmp.eq.s32.totalorder %s9, 3
    %p26 = por %p24, %p25
    %p27 = scmp.ne.s32.totalorder %s19, %s22
    %p28 = scmp.eq.s32.totalorder %s9, 0
    %p29 = por %p27, %p28
    %p30 = scmp.ne.s32.totalorder %s19, %s22
    %p31 = scmp.eq.s32.totalorder %s14, 3
    %p32 = por %p30, %p31
    %p33 = scmp.ne.s32.totalorder %s22, %s23
    %p34 = scmp.eq.s32.totalorder %s14, 0
    %p35 = por %p33, %p34
    %p36 = scmp.ne.s32.totalorder %s22, %s23
    %p37 = scmp.eq.s32.totalorder %s15, 3
    %p38 = por %p36, %p37
    %p40 = scmp.ne.s32.totalorder %s23, %s39
    %p41 = scmp.eq.s32.totalorder %s15, 0
    %p42 = por %p40, %p41
    %s44 = sadd.s32 %s43, 1
    %p47 = scmp.eq.s32.totalorder %s9, 3
    %p48 = scmp.ne.s32.totalorder %s43, %s45
    %p49 = scmp.eq.s32.totalorder %s9, 0
    %p50 = por %p48, %p49
    %p51 = scmp.ne.s32.totalorder %s43, %s45
    %p52 = scmp.eq.s32.totalorder %s14, 3
    %p53 = por %p51, %p52
    %p54 = scmp.ne.s32.totalorder %s45, %s46
    %p55 = scmp.eq.s32.totalorder %s14, 0
    %p56 = por %p54, %p55
    %p57 = scmp.ne.s32.totalorder %s45, %s46
    %p58 = scmp.eq.s32.totalorder %s15, 3
    %p59 = por %p57, %p58
    %p61 = scmp.ne.s32.totalorder %s46, %s60
    %p62 = scmp.eq.s32.totalorder %s15, 0
    %p63 = por %p61, %p62
    %s65 = sadd.s32 %s64, 1
    %p68 = scmp.eq.s32.totalorder %s9, 3
    %p69 = scmp.ne.s32.totalorder %s64, %s66
    %p70 = scmp.eq.s32.totalorder %s9, 0
    %p71 = por %p69, %p70
    %p72 = scmp.ne.s32.totalorder %s64, %s66
    %p73 = scmp.eq.s32.totalorder %s14, 3
    %p74 = por %p72, %p73
    %p75 = scmp.ne.s32.totalorder %s66, %s67
    %p76 = scmp.eq.s32.totalorder %s14, 0
    %p77 = por %p75, %p76
    %p78 = scmp.ne.s32.totalorder %s66, %s67
    %p79 = scmp.eq.s32.totalorder %s15, 3
    %p80 = por %p78, %p79
    %p82 = scmp.ne.s32.totalorder %s67, %s81
    %p83 = scmp.eq.s32.totalorder %s15, 0
    %p84 = por %p82, %p83
    %s85 = ssub.s32 %s9, %s16
    %p86 = scmp.eq.s32.totalorder %s85, 0
    %s88 = sadd.s32 %s87, 1
    %s89 = scalar_select %p86, %s87, %s88
    %p92 = pneg %p86
    %p93 = scmp.eq.s32.totalorder %s9, 3
    %p94 = por %p92, %p93
    %p95 = scmp.ne.s32.totalorder %s87, %s90
    %p96 = scmp.eq.s32.totalorder %s9, 0
    %p97 = por %p95, %p96
    %p98 = scmp.ne.s32.totalorder %s87, %s90
    %p99 = scmp.eq.s32.totalorder %s14, 3
    %p100 = por %p98, %p99
    %p101 = scmp.ne.s32.totalorder %s90, %s91
    %p102 = scmp.eq.s32.totalorder %s14, 0
    %p103 = por %p101, %p102
    %p104 = scmp.ne.s32.totalorder %s90, %s91
    %p105 = scmp.eq.s32.totalorder %s15, 3
    %p106 = por %p104, %p105
    %p108 = scmp.ne.s32.totalorder %s91, %s107
    %p109 = scmp.eq.s32.totalorder %s15, 0
    %p110 = por %p108, %p109
    %p111 = scmp.le.s32.totalorder 1, %s9
    %p112 = scmp.lt.s32.totalorder %s9, 5
    %p113 = pnand %p111, %p112
    %p114 = pneg %p113
    // Predicated region
    $region9: #{basic_block_forward.9} parent=5 // pred_check
      _
    $region10: #{basic_block_forward.9} parent=5 // pred_check_branch
      %116 = sbr.rel (%p113) target = $region12
    $region11: #{basic_block_forward.9} parent=5 // pred_region
      %s117 = ssub.s32 %s9, 1
      // Predicated region
      $region13: #{basic_block_forward.9} parent=11 // pred_check
        %p118 = pneg %p56
      $region14: #{basic_block_forward.9} parent=11 // pred_check_branch
        %120 = sbr.rel (%p118) target = $region16
      $region15: #{basic_block_forward.9} parent=11 // pred_region
        _
      $region16: #{basic_block_forward.9} parent=11 // pred_fallthru
        _
      // Predicated region
      $region17: #{basic_block_forward.9} parent=11 // pred_check
        %p121 = pneg %p77
      $region18: #{basic_block_forward.9} parent=11 // pred_check_branch
        %123 = sbr.rel (%p121) target = $region20
      $region19: #{basic_block_forward.9} parent=11 // pred_region
        _
      $region20: #{basic_block_forward.9} parent=11 // pred_fallthru
        _
    $region12: #{basic_block_forward.9} parent=5 // pred_fallthru
      _
    %p124 = scmp.lt.s32.totalorder %s9, 4
    // Predicated region
    $region21: #{basic_block_forward.9} parent=5 // pred_check
      %p125 = pneg %p124
    $region22: #{basic_block_forward.9} parent=5 // pred_check_branch
      %127 = sbr.rel (%p125) target = $region24
    $region23: #{basic_block_forward.9} parent=5 // pred_region
      // Predicated region
      $region25: #{basic_block_forward.9} parent=23 // pred_check
        %p128 = pneg %p29
      $region26: #{basic_block_forward.9} parent=23 // pred_check_branch
        %130 = sbr.rel (%p128) target = $region28
      $region27: #{basic_block_forward.9} parent=23 // pred_region
        %s131 = smul.u32 16, %s9
        %p132 = scmp.lt.s32.totalorder %s131, 63
        %s133 = scalar_select %p132, %s131, 63
        %s134 = smul.addr %s133, 8
        %s135 = scalar_lea.vmem %s0, %s134
        %s136 = smul.u32 16, %s9
      $region28: #{basic_block_forward.9} parent=23 // pred_fallthru
        _
    $region24: #{basic_block_forward.9} parent=5 // pred_fallthru
      _
    %p137 = scmp.le.s32.totalorder 1, %s9
    %p138 = scmp.lt.s32.totalorder %s9, 5
    %p139 = pnand %p137, %p138
    %p140 = pneg %p139
    // Predicated region
    $region29: #{basic_block_forward.9} parent=5 // pred_check
      _
    $region30: #{basic_block_forward.9} parent=5 // pred_check_branch
      %142 = sbr.rel (%p139) target = $region32
    $region31: #{basic_block_forward.9} parent=5 // pred_region
      %s143 = ssub.s32 %s9, 1
      %s144 = smul.u32 16, %s14
      %p145 = scmp.lt.s32.totalorder %s144, 63
      %s146 = scalar_select %p145, %s144, 63
      %s147 = smul.addr %s146, 8
      %s148 = scalar_lea.vmem %s0, %s147
      %p149 = pneg %p35
      %p150 = pneg %p32
      %p151 = pneg %p56
      %p152 = pneg %p53
      %p153 = pneg %p77
      %p154 = pneg %p74
      %p155 = pneg %p103
      %p156 = pneg %p100
      %s157 = smul.u32 16, %s14
      %p158 = scmp.lt.s32.totalorder %s157, 63
      %s159 = scalar_select %p158, %s157, 63
      %s160 = smul.addr %s159, 8
      %s161 = scalar_lea.vmem %s3, %s160
      %s162 = smul.u32 16, %s14
      %p163 = scmp.lt.s32.totalorder %s162, 63
      %s164 = scalar_select %p163, %s162, 63
      %s165 = smul.addr %s164, 8
      %s166 = scalar_lea.vmem %s0, %s165
      %s167 = smul.u32 16, %s14
      %s168 = smul.u32 16, %s14
      %p169 = scmp.lt.s32.totalorder %s168, 63
      %s170 = scalar_select %p169, %s168, 63
      %s171 = smul.addr %s170, 8
      %s172 = scalar_lea.vmem %s3, %s171
      %s173 = smul.u32 16, %s14
      %v174 = vld [vmem:[%s166] sm:$0xff]
      %v175 = vld [vmem:[%s166 + $0x8] sm:$0xff]
      %v176 = vld [vmem:[%s166 + $0x10] sm:$0xff]
      %v177 = vld [vmem:[%s166 + $0x18] sm:$0xff]
      %v178 = vld [vmem:[%s166 + $0x20] sm:$0xff]
      %v179 = vld [vmem:[%s166 + $0x28] sm:$0xff]
      %v180 = vld [vmem:[%s166 + $0x30] sm:$0xff]
      %v181 = vld [vmem:[%s166 + $0x38] sm:$0xff]
      %v182 = vld [vmem:[%s166 + $0x40] sm:$0xff]
      %v183 = vld [vmem:[%s166 + $0x48] sm:$0xff]
      %v184 = vld [vmem:[%s166 + $0x50] sm:$0xff]
      %v185 = vld [vmem:[%s166 + $0x58] sm:$0xff]
      %v186 = vld [vmem:[%s166 + $0x60] sm:$0xff]
      %v187 = vld [vmem:[%s166 + $0x68] sm:$0xff]
      %v188 = vld [vmem:[%s166 + $0x70] sm:$0xff]
      %v189 = vld [vmem:[%s166 + $0x78] sm:$0xff]
      %v190 = vld [vmem:[%s1] sm:$0x1]
      %v192 = vperm.slane %v190, 0
      %v194 = vmul.f32 %v174, %v192
      %v195 = vmul.f32 %v175, %v192
      %v196 = vmul.f32 %v176, %v192
      %v197 = vmul.f32 %v177, %v192
      %v198 = vmul.f32 %v178, %v192
      %v199 = vmul.f32 %v179, %v192
      %v200 = vmul.f32 %v180, %v192
      %v201 = vmul.f32 %v181, %v192
      %v202 = vmul.f32 %v182, %v192
      %v203 = vmul.f32 %v183, %v192
      %v204 = vmul.f32 %v184, %v192
      %v205 = vmul.f32 %v185, %v192
      %v206 = vmul.f32 %v186, %v192
      %v207 = vmul.f32 %v187, %v192
      %v208 = vmul.f32 %v188, %v192
      %v209 = vmul.f32 %v189, %v192
      %v210 = vld [vmem:[%s2] sm:$0x1]
      %v212 = vperm.slane %v210, 0
      %v214 = vadd.f32 %v194, %v212
      %v215 = vadd.f32 %v195, %v212
      %v216 = vadd.f32 %v196, %v212
      %v217 = vadd.f32 %v197, %v212
      %v218 = vadd.f32 %v198, %v212
      %v219 = vadd.f32 %v199, %v212
      %v220 = vadd.f32 %v200, %v212
      %v221 = vadd.f32 %v201, %v212
      %v222 = vadd.f32 %v202, %v212
      %v223 = vadd.f32 %v203, %v212
      %v224 = vadd.f32 %v204, %v212
      %v225 = vadd.f32 %v205, %v212
      %v226 = vadd.f32 %v206, %v212
      %v227 = vadd.f32 %v207, %v212
      %v228 = vadd.f32 %v208, %v212
      %v229 = vadd.f32 %v209, %v212
      %230 = vst [vmem:[%s172] sm:$0xff] %v214
      %231 = vst [vmem:[%s172 + $0x8] sm:$0xff] %v215
      %232 = vst [vmem:[%s172 + $0x10] sm:$0xff] %v216
      %233 = vst [vmem:[%s172 + $0x18] sm:$0xff] %v217
      %234 = vst [vmem:[%s172 + $0x20] sm:$0xff] %v218
      %235 = vst [vmem:[%s172 + $0x28] sm:$0xff] %v219
      %236 = vst [vmem:[%s172 + $0x30] sm:$0xff] %v220
      %237 = vst [vmem:[%s172 + $0x38] sm:$0xff] %v221
      %238 = vst [vmem:[%s172 + $0x40] sm:$0xff] %v222
      %239 = vst [vmem:[%s172 + $0x48] sm:$0xff] %v223
      %240 = vst [vmem:[%s172 + $0x50] sm:$0xff] %v224
      %241 = vst [vmem:[%s172 + $0x58] sm:$0xff] %v225
      %242 = vst [vmem:[%s172 + $0x60] sm:$0xff] %v226
      %243 = vst [vmem:[%s172 + $0x68] sm:$0xff] %v227
      %244 = vst [vmem:[%s172 + $0x70] sm:$0xff] %v228
      %245 = vst [vmem:[%s172 + $0x78] sm:$0xff] %v229
      %s246 = smul.u32 16, %s14
      %p247 = scmp.lt.s32.totalorder %s246, 63
      %s248 = scalar_select %p247, %s246, 63
      %s249 = smul.addr %s248, 8
      %s250 = scalar_lea.vmem %s3, %s249
      // Predicated region
      $region33: #{basic_block_forward.9} parent=31 // pred_check
        %p251 = pneg %p100
      $region34: #{basic_block_forward.9} parent=31 // pred_check_branch
        %253 = sbr.rel (%p251) target = $region36
      $region35: #{basic_block_forward.9} parent=31 // pred_region
        %s254 = smul.u32 16, %s14
      $region36: #{basic_block_forward.9} parent=31 // pred_fallthru
        _
    $region32: #{basic_block_forward.9} parent=5 // pred_fallthru
      _
    %p255 = scmp.le.s32.totalorder 2, %s9
    // Predicated region
    $region37: #{basic_block_forward.9} parent=5 // pred_check
      %p256 = pneg %p255
    $region38: #{basic_block_forward.9} parent=5 // pred_check_branch
      %258 = sbr.rel (%p256) target = $region40
    $region39: #{basic_block_forward.9} parent=5 // pred_region
      %s259 = ssub.s32 %s9, 2
      // Predicated region
      $region41: #{basic_block_forward.9} parent=39 // pred_check
        %p260 = pneg %p106
      $region42: #{basic_block_forward.9} parent=39 // pred_check_branch
        %262 = sbr.rel (%p260) target = $region44
      $region43: #{basic_block_forward.9} parent=39 // pred_region
        %s263 = smul.u32 16, %s15
        %p264 = scmp.lt.s32.totalorder %s263, 63
        %s265 = scalar_select %p264, %s263, 63
        %s266 = smul.addr %s265, 8
        %s267 = scalar_lea.vmem %s3, %s266
      $region44: #{basic_block_forward.9} parent=39 // pred_fallthru
        _
    $region40: #{basic_block_forward.9} parent=5 // pred_fallthru
      _
  $region6: #{basic_block_forward.9} parent=0 // loop_footer
    %s13 = sadd.s32 1, %s9
  $region7: #{basic_block_forward.9} parent=0 // loop_footer_branch
    %8 = sbr.rel target = $region3
  $region8: #{basic_block_forward.9} parent=0 // loop_exit
    _

// kernel: basic_block_forward.11
$region0: #{basic_block_forward.11}
  #allocation0 [shape = 'u32[]', space=smem, size = 0x4, offset = 0x4, fixed_abs, tag = 'smem constant byte address 0x4 - core index']
  #allocation1 [shape = 'u32[72,128]{1,0:T(1,128)}', space=vmem, size = 0x9000, scoped, tag = 'internal scratch']
  %s0 = inlined_call_operand.vmem [shape: f32[512,128], index: 0, kind: input, shape index: {}]
  %s1 = inlined_call_operand.vmem [shape: f32[1,128], index: 1, kind: input, shape index: {}]
  %s2 = inlined_call_operand.vmem [shape: f32[1,128], index: 2, kind: input, shape index: {}]
  %s3 = inlined_call_operand.vmem [shape: f32[512,128], index: 3, kind: input, shape index: {}]
  %s4 = inlined_call_operand.vmem [shape: f32[512,128], index: 4, kind: output, shape index: {}]
  %s5 = sld [smem:[#allocation0]]
  $region49: #{basic_block_forward.11} parent=0
    _
  %s7 = ssub.s32 1, %s5
  %s8 = scalar_select 0, %s7, %s5
  loop: start=0, step=1, limit=6
  $region2: #{basic_block_forward.11} parent=0 // loop_pre_header
    _
  $region3: #{basic_block_forward.11} parent=0 // loop_header
    %s10 = sphi 0, %s14
    %p11 = scmp.ge.s32.totalorder %s10, 6
    %s20 = sphi 0, %s22
    %s23 = sphi 0, %s20
    %s24 = sphi 0, %s23
    %s40 = sphi 0, %s24
    %s44 = sphi 0, %s44
    %s46 = sphi 0, %s44
    %s47 = sphi 0, %s46
    %s61 = sphi 0, %s47
    %s65 = sphi 0, %s65
    %s67 = sphi 0, %s65
    %s68 = sphi 0, %s67
    %s82 = sphi 0, %s68
    %s88 = sphi 0, %s90
    %s91 = sphi 0, %s88
    %s92 = sphi 0, %s91
    %s108 = sphi 0, %s92
    %s114 = sphi 0, %s116
    %s117 = sphi 0, %s114
    %s118 = sphi 0, %s117
    %s134 = sphi 0, %s118
  $region4: #{basic_block_forward.11} parent=0 // loop_header_branch
    %13 = sbr.rel (%p11) target = $region8
  $region5: #{basic_block_forward.11} parent=0 // loop_body
    %s15 = ssub.s32 %s10, 1
    %s16 = ssub.s32 %s10, 2
    %s17 = sadd.s32 %s10, 1
    %s18 = ssub.s32 %s10, %s17
    %p19 = scmp.eq.s32.totalorder %s18, 0
    %s21 = sadd.s32 %s20, 1
    %s22 = scalar_select %p19, %s20, %s21
    %p25 = pneg %p19
    %p26 = scmp.eq.s32.totalorder %s10, 3
    %p27 = por %p25, %p26
    %p28 = scmp.ne.s32.totalorder %s20, %s23
    %p29 = scmp.eq.s32.totalorder %s10, 0
    %p30 = por %p28, %p29
    %p31 = scmp.ne.s32.totalorder %s20, %s23
    %p32 = scmp.eq.s32.totalorder %s15, 3
    %p33 = por %p31, %p32
    %p34 = scmp.ne.s32.totalorder %s23, %s24
    %p35 = scmp.eq.s32.totalorder %s15, 0
    %p36 = por %p34, %p35
    %p37 = scmp.ne.s32.totalorder %s23, %s24
    %p38 = scmp.eq.s32.totalorder %s16, 3
    %p39 = por %p37, %p38
    %p41 = scmp.ne.s32.totalorder %s24, %s40
    %p42 = scmp.eq.s32.totalorder %s16, 0
    %p43 = por %p41, %p42
    %s45 = sadd.s32 %s44, 1
    %p48 = scmp.eq.s32.totalorder %s10, 3
    %p49 = scmp.ne.s32.totalorder %s44, %s46
    %p50 = scmp.eq.s32.totalorder %s10, 0
    %p51 = por %p49, %p50
    %p52 = scmp.ne.s32.totalorder %s44, %s46
    %p53 = scmp.eq.s32.totalorder %s15, 3
    %p54 = por %p52, %p53
    %p55 = scmp.ne.s32.totalorder %s46, %s47
    %p56 = scmp.eq.s32.totalorder %s15, 0
    %p57 = por %p55, %p56
    %p58 = scmp.ne.s32.totalorder %s46, %s47
    %p59 = scmp.eq.s32.totalorder %s16, 3
    %p60 = por %p58, %p59
    %p62 = scmp.ne.s32.totalorder %s47, %s61
    %p63 = scmp.eq.s32.totalorder %s16, 0
    %p64 = por %p62, %p63
    %s66 = sadd.s32 %s65, 1
    %p69 = scmp.eq.s32.totalorder %s10, 3
    %p70 = scmp.ne.s32.totalorder %s65, %s67
    %p71 = scmp.eq.s32.totalorder %s10, 0
    %p72 = por %p70, %p71
    %p73 = scmp.ne.s32.totalorder %s65, %s67
    %p74 = scmp.eq.s32.totalorder %s15, 3
    %p75 = por %p73, %p74
    %p76 = scmp.ne.s32.totalorder %s67, %s68
    %p77 = scmp.eq.s32.totalorder %s15, 0
    %p78 = por %p76, %p77
    %p79 = scmp.ne.s32.totalorder %s67, %s68
    %p80 = scmp.eq.s32.totalorder %s16, 3
    %p81 = por %p79, %p80
    %p83 = scmp.ne.s32.totalorder %s68, %s82
    %p84 = scmp.eq.s32.totalorder %s16, 0
    %p85 = por %p83, %p84
    %s86 = ssub.s32 %s10, %s17
    %p87 = scmp.eq.s32.totalorder %s86, 0
    %s89 = sadd.s32 %s88, 1
    %s90 = scalar_select %p87, %s88, %s89
    %p93 = pneg %p87
    %p94 = scmp.eq.s32.totalorder %s10, 3
    %p95 = por %p93, %p94
    %p96 = scmp.ne.s32.totalorder %s88, %s91
    %p97 = scmp.eq.s32.totalorder %s10, 0
    %p98 = por %p96, %p97
    %p99 = scmp.ne.s32.totalorder %s88, %s91
    %p100 = scmp.eq.s32.totalorder %s15, 3
    %p101 = por %p99, %p100
    %p102 = scmp.ne.s32.totalorder %s91, %s92
    %p103 = scmp.eq.s32.totalorder %s15, 0
    %p104 = por %p102, %p103
    %p105 = scmp.ne.s32.totalorder %s91, %s92
    %p106 = scmp.eq.s32.totalorder %s16, 3
    %p107 = por %p105, %p106
    %p109 = scmp.ne.s32.totalorder %s92, %s108
    %p110 = scmp.eq.s32.totalorder %s16, 0
    %p111 = por %p109, %p110
    %s112 = ssub.s32 %s10, %s17
    %p113 = scmp.eq.s32.totalorder %s112, 0
    %s115 = sadd.s32 %s114, 1
    %s116 = scalar_select %p113, %s114, %s115
    %p119 = pneg %p113
    %p120 = scmp.eq.s32.totalorder %s10, 3
    %p121 = por %p119, %p120
    %p122 = scmp.ne.s32.totalorder %s114, %s117
    %p123 = scmp.eq.s32.totalorder %s10, 0
    %p124 = por %p122, %p123
    %p125 = scmp.ne.s32.totalorder %s114, %s117
    %p126 = scmp.eq.s32.totalorder %s15, 3
    %p127 = por %p125, %p126
    %p128 = scmp.ne.s32.totalorder %s117, %s118
    %p129 = scmp.eq.s32.totalorder %s15, 0
    %p130 = por %p128, %p129
    %p131 = scmp.ne.s32.totalorder %s117, %s118
    %p132 = scmp.eq.s32.totalorder %s16, 3
    %p133 = por %p131, %p132
    %p135 = scmp.ne.s32.totalorder %s118, %s134
    %p136 = scmp.eq.s32.totalorder %s16, 0
    %p137 = por %p135, %p136
    %p138 = scmp.le.s32.totalorder 1, %s10
    %p139 = scmp.lt.s32.totalorder %s10, 5
    %p140 = pnand %p138, %p139
    %p141 = pneg %p140
    // Predicated region
    $region9: #{basic_block_forward.11} parent=5 // pred_check
      _
    $region10: #{basic_block_forward.11} parent=5 // pred_check_branch
      %143 = sbr.rel (%p140) target = $region12
    $region11: #{basic_block_forward.11} parent=5 // pred_region
      %s144 = ssub.s32 %s10, 1
      // Predicated region
      $region13: #{basic_block_forward.11} parent=11 // pred_check
        %p145 = pneg %p57
      $region14: #{basic_block_forward.11} parent=11 // pred_check_branch
        %147 = sbr.rel (%p145) target = $region16
      $region15: #{basic_block_forward.11} parent=11 // pred_region
        _
      $region16: #{basic_block_forward.11} parent=11 // pred_fallthru
        _
      // Predicated region
      $region17: #{basic_block_forward.11} parent=11 // pred_check
        %p148 = pneg %p78
      $region18: #{basic_block_forward.11} parent=11 // pred_check_branch
        %150 = sbr.rel (%p148) target = $region20
      $region19: #{basic_block_forward.11} parent=11 // pred_region
        _
      $region20: #{basic_block_forward.11} parent=11 // pred_fallthru
        _
    $region12: #{basic_block_forward.11} parent=5 // pred_fallthru
      _
    %p151 = scmp.lt.s32.totalorder %s10, 4
    // Predicated region
    $region21: #{basic_block_forward.11} parent=5 // pred_check
      %p152 = pneg %p151
    $region22: #{basic_block_forward.11} parent=5 // pred_check_branch
      %154 = sbr.rel (%p152) target = $region24
    $region23: #{basic_block_forward.11} parent=5 // pred_region
      // Predicated region
      $region25: #{basic_block_forward.11} parent=23 // pred_check
        %p155 = pneg %p30
      $region26: #{basic_block_forward.11} parent=23 // pred_check_branch
        %157 = sbr.rel (%p155) target = $region28
      $region27: #{basic_block_forward.11} parent=23 // pred_region
        %s158 = smul.u32 16, %s10
        %p159 = scmp.lt.s32.totalorder %s158, 63
        %s160 = scalar_select %p159, %s158, 63
        %s161 = smul.addr %s160, 8
        %s162 = scalar_lea.vmem %s0, %s161
        %s163 = smul.u32 16, %s10
      $region28: #{basic_block_forward.11} parent=23 // pred_fallthru
        _
      // Predicated region
      $region29: #{basic_block_forward.11} parent=23 // pred_check
        %p164 = pneg %p98
      $region30: #{basic_block_forward.11} parent=23 // pred_check_branch
        %166 = sbr.rel (%p164) target = $region32
      $region31: #{basic_block_forward.11} parent=23 // pred_region
        %s167 = smul.u32 16, %s10
        %p168 = scmp.lt.s32.totalorder %s167, 63
        %s169 = scalar_select %p168, %s167, 63
        %s170 = smul.addr %s169, 8
        %s171 = scalar_lea.vmem %s3, %s170
        %s172 = smul.u32 16, %s10
      $region32: #{basic_block_forward.11} parent=23 // pred_fallthru
        _
    $region24: #{basic_block_forward.11} parent=5 // pred_fallthru
      _
    %p173 = scmp.le.s32.totalorder 1, %s10
    %p174 = scmp.lt.s32.totalorder %s10, 5
    %p175 = pnand %p173, %p174
    %p176 = pneg %p175
    // Predicated region
    $region33: #{basic_block_forward.11} parent=5 // pred_check
      _
    $region34: #{basic_block_forward.11} parent=5 // pred_check_branch
      %178 = sbr.rel (%p175) target = $region36
    $region35: #{basic_block_forward.11} parent=5 // pred_region
      %s179 = ssub.s32 %s10, 1
      %s180 = smul.u32 16, %s15
      %p181 = scmp.lt.s32.totalorder %s180, 63
      %s182 = scalar_select %p181, %s180, 63
      %s183 = smul.addr %s182, 8
      %s184 = scalar_lea.vmem %s0, %s183
      %p185 = pneg %p36
      %p186 = pneg %p33
      %p187 = pneg %p57
      %p188 = pneg %p54
      %p189 = pneg %p78
      %p190 = pneg %p75
      %s191 = smul.u32 16, %s15
      %p192 = scmp.lt.s32.totalorder %s191, 63
      %s193 = scalar_select %p192, %s191, 63
      %s194 = smul.addr %s193, 8
      %s195 = scalar_lea.vmem %s3, %s194
      %p196 = pneg %p104
      %p197 = pneg %p101
      %p198 = pneg %p130
      %p199 = pneg %p127
      %s200 = smul.u32 16, %s15
      %p201 = scmp.lt.s32.totalorder %s200, 63
      %s202 = scalar_select %p201, %s200, 63
      %s203 = smul.addr %s202, 8
      %s204 = scalar_lea.vmem %s4, %s203
      %s205 = smul.u32 16, %s15
      %p206 = scmp.lt.s32.totalorder %s205, 63
      %s207 = scalar_select %p206, %s205, 63
      %s208 = smul.addr %s207, 8
      %s209 = scalar_lea.vmem %s0, %s208
      %s210 = smul.u32 16, %s15
      %s211 = smul.u32 16, %s15
      %p212 = scmp.lt.s32.totalorder %s211, 63
      %s213 = scalar_select %p212, %s211, 63
      %s214 = smul.addr %s213, 8
      %s215 = scalar_lea.vmem %s3, %s214
      %s216 = smul.u32 16, %s15
      %s217 = smul.u32 16, %s15
      %p218 = scmp.lt.s32.totalorder %s217, 63
      %s219 = scalar_select %p218, %s217, 63
      %s220 = smul.addr %s219, 8
      %s221 = scalar_lea.vmem %s4, %s220
      %s222 = smul.u32 16, %s15
      %v223 = vld [vmem:[%s209] sm:$0xff]
      %v224 = vld [vmem:[%s209 + $0x8] sm:$0xff]
      %v225 = vld [vmem:[%s209 + $0x10] sm:$0xff]
      %v226 = vld [vmem:[%s209 + $0x18] sm:$0xff]
      %v227 = vld [vmem:[%s209 + $0x20] sm:$0xff]
      %v228 = vld [vmem:[%s209 + $0x28] sm:$0xff]
      %v229 = vld [vmem:[%s209 + $0x30] sm:$0xff]
      %v230 = vld [vmem:[%s209 + $0x38] sm:$0xff]
      %v231 = vld [vmem:[%s209 + $0x40] sm:$0xff]
      %v232 = vld [vmem:[%s209 + $0x48] sm:$0xff]
      %v233 = vld [vmem:[%s209 + $0x50] sm:$0xff]
      %v234 = vld [vmem:[%s209 + $0x58] sm:$0xff]
      %v235 = vld [vmem:[%s209 + $0x60] sm:$0xff]
      %v236 = vld [vmem:[%s209 + $0x68] sm:$0xff]
      %v237 = vld [vmem:[%s209 + $0x70] sm:$0xff]
      %v238 = vld [vmem:[%s209 + $0x78] sm:$0xff]
      %v239 = vld [vmem:[%s1] sm:$0x1]
      %v241 = vperm.slane %v239, 0
      %v243 = vmul.f32 %v223, %v241
      %v244 = vmul.f32 %v224, %v241
      %v245 = vmul.f32 %v225, %v241
      %v246 = vmul.f32 %v226, %v241
      %v247 = vmul.f32 %v227, %v241
      %v248 = vmul.f32 %v228, %v241
      %v249 = vmul.f32 %v229, %v241
      %v250 = vmul.f32 %v230, %v241
      %v251 = vmul.f32 %v231, %v241
      %v252 = vmul.f32 %v232, %v241
      %v253 = vmul.f32 %v233, %v241
      %v254 = vmul.f32 %v234, %v241
      %v255 = vmul.f32 %v235, %v241
      %v256 = vmul.f32 %v236, %v241
      %v257 = vmul.f32 %v237, %v241
      %v258 = vmul.f32 %v238, %v241
      %v259 = vld [vmem:[%s2] sm:$0x1]
      %v261 = vperm.slane %v259, 0
      %v263 = vadd.f32 %v243, %v261
      %v264 = vadd.f32 %v244, %v261
      %v265 = vadd.f32 %v245, %v261
      %v266 = vadd.f32 %v246, %v261
      %v267 = vadd.f32 %v247, %v261
      %v268 = vadd.f32 %v248, %v261
      %v269 = vadd.f32 %v249, %v261
      %v270 = vadd.f32 %v250, %v261
      %v271 = vadd.f32 %v251, %v261
      %v272 = vadd.f32 %v252, %v261
      %v273 = vadd.f32 %v253, %v261
      %v274 = vadd.f32 %v254, %v261
      %v275 = vadd.f32 %v255, %v261
      %v276 = vadd.f32 %v256, %v261
      %v277 = vadd.f32 %v257, %v261
      %v278 = vadd.f32 %v258, %v261
      %v279 = vld [vmem:[%s215] sm:$0xff]
      %v280 = vld [vmem:[%s215 + $0x8] sm:$0xff]
      %v281 = vld [vmem:[%s215 + $0x10] sm:$0xff]
      %v282 = vld [vmem:[%s215 + $0x18] sm:$0xff]
      %v283 = vld [vmem:[%s215 + $0x20] sm:$0xff]
      %v284 = vld [vmem:[%s215 + $0x28] sm:$0xff]
      %v285 = vld [vmem:[%s215 + $0x30] sm:$0xff]
      %v286 = vld [vmem:[%s215 + $0x38] sm:$0xff]
      %v287 = vld [vmem:[%s215 + $0x40] sm:$0xff]
      %v288 = vld [vmem:[%s215 + $0x48] sm:$0xff]
      %v289 = vld [vmem:[%s215 + $0x50] sm:$0xff]
      %v290 = vld [vmem:[%s215 + $0x58] sm:$0xff]
      %v291 = vld [vmem:[%s215 + $0x60] sm:$0xff]
      %v292 = vld [vmem:[%s215 + $0x68] sm:$0xff]
      %v293 = vld [vmem:[%s215 + $0x70] sm:$0xff]
      %v294 = vld [vmem:[%s215 + $0x78] sm:$0xff]
      %v295 = vadd.f32 %v263, %v279
      %v296 = vadd.f32 %v264, %v280
      %v297 = vadd.f32 %v265, %v281
      %v298 = vadd.f32 %v266, %v282
      %v299 = vadd.f32 %v267, %v283
      %v300 = vadd.f32 %v268, %v284
      %v301 = vadd.f32 %v269, %v285
      %v302 = vadd.f32 %v270, %v286
      %v303 = vadd.f32 %v271, %v287
      %v304 = vadd.f32 %v272, %v288
      %v305 = vadd.f32 %v273, %v289
      %v306 = vadd.f32 %v274, %v290
      %v307 = vadd.f32 %v275, %v291
      %v308 = vadd.f32 %v276, %v292
      %v309 = vadd.f32 %v277, %v293
      %v310 = vadd.f32 %v278, %v294
      %v311 = vmax.f32 %v295, 0.0
      %v312 = vmax.f32 %v296, 0.0
      %v313 = vmax.f32 %v297, 0.0
      %v314 = vmax.f32 %v298, 0.0
      %v315 = vmax.f32 %v299, 0.0
      %v316 = vmax.f32 %v300, 0.0
      %v317 = vmax.f32 %v301, 0.0
      %v318 = vmax.f32 %v302, 0.0
      %v319 = vmax.f32 %v303, 0.0
      %v320 = vmax.f32 %v304, 0.0
      %v321 = vmax.f32 %v305, 0.0
      %v322 = vmax.f32 %v306, 0.0
      %v323 = vmax.f32 %v307, 0.0
      %v324 = vmax.f32 %v308, 0.0
      %v325 = vmax.f32 %v309, 0.0
      %v326 = vmax.f32 %v310, 0.0
      %327 = vst [vmem:[%s221] sm:$0xff] %v311
      %328 = vst [vmem:[%s221 + $0x8] sm:$0xff] %v312
      %329 = vst [vmem:[%s221 + $0x10] sm:$0xff] %v313
      %330 = vst [vmem:[%s221 + $0x18] sm:$0xff] %v314
      %331 = vst [vmem:[%s221 + $0x20] sm:$0xff] %v315
      %332 = vst [vmem:[%s221 + $0x28] sm:$0xff] %v316
      %333 = vst [vmem:[%s221 + $0x30] sm:$0xff] %v317
      %334 = vst [vmem:[%s221 + $0x38] sm:$0xff] %v318
      %335 = vst [vmem:[%s221 + $0x40] sm:$0xff] %v319
      %336 = vst [vmem:[%s221 + $0x48] sm:$0xff] %v320
      %337 = vst [vmem:[%s221 + $0x50] sm:$0xff] %v321
      %338 = vst [vmem:[%s221 + $0x58] sm:$0xff] %v322
      %339 = vst [vmem:[%s221 + $0x60] sm:$0xff] %v323
      %340 = vst [vmem:[%s221 + $0x68] sm:$0xff] %v324
      %341 = vst [vmem:[%s221 + $0x70] sm:$0xff] %v325
      %342 = vst [vmem:[%s221 + $0x78] sm:$0xff] %v326
      %s343 = smul.u32 16, %s15
      %p344 = scmp.lt.s32.totalorder %s343, 63
      %s345 = scalar_select %p344, %s343, 63
      %s346 = smul.addr %s345, 8
      %s347 = scalar_lea.vmem %s4, %s346
      // Predicated region
      $region37: #{basic_block_forward.11} parent=35 // pred_check
        %p348 = pneg %p127
      $region38: #{basic_block_forward.11} parent=35 // pred_check_branch
        %350 = sbr.rel (%p348) target = $region40
      $region39: #{basic_block_forward.11} parent=35 // pred_region
        %s351 = smul.u32 16, %s15
      $region40: #{basic_block_forward.11} parent=35 // pred_fallthru
        _
    $region36: #{basic_block_forward.11} parent=5 // pred_fallthru
      _
    %p352 = scmp.le.s32.totalorder 2, %s10
    // Predicated region
    $region41: #{basic_block_forward.11} parent=5 // pred_check
      %p353 = pneg %p352
    $region42: #{basic_block_forward.11} parent=5 // pred_check_branch
      %355 = sbr.rel (%p353) target = $region44
    $region43: #{basic_block_forward.11} parent=5 // pred_region
      %s356 = ssub.s32 %s10, 2
      // Predicated region
      $region45: #{basic_block_forward.11} parent=43 // pred_check
        %p357 = pneg %p133
      $region46: #{basic_block_forward.11} parent=43 // pred_check_branch
        %359 = sbr.rel (%p357) target = $region48
      $region47: #{basic_block_forward.11} parent=43 // pred_region
        %s360 = smul.u32 16, %s16
        %p361 = scmp.lt.s32.totalorder %s360, 63
        %s362 = scalar_select %p361, %s360, 63
        %s363 = smul.addr %s362, 8
        %s364 = scalar_lea.vmem %s4, %s363
      $region48: #{basic_block_forward.11} parent=43 // pred_fallthru
        _
    $region44: #{basic_block_forward.11} parent=5 // pred_fallthru
      _
  $region6: #{basic_block_forward.11} parent=0 // loop_footer
    %s14 = sadd.s32 1, %s10
  $region7: #{basic_block_forward.11} parent=0 // loop_footer_branch
    %9 = sbr.rel target = $region3
  $region8: #{basic_block_forward.11} parent=0 // loop_exit
    _

</llo_original>
